<compile_context>
chip_gen: v6e
topology: v6e:2x2x1
jax: 0.10.0
libtpu: 0.0.40
codegen_flags: <defaults>
</compile_context>

<pallas_src>
import numpy as np
import jax
import jax.numpy as jnp
from jax.experimental import pallas as pl
from jax.experimental.pallas import tpu as pltpu


def _cdiv(a, b):
    return -(-a // b)


def _update_lengths(lengths, pad, k, s, dil=1):
    # Mirrors BaseConv2d._get_sequence_lengths: ((L + 2p - d(k-1) - 1)//s) + 1
    return ((lengths + 2 * pad - dil * (k - 1) - 1) // s + 1).astype(jnp.int32)


def _plan_layers(x_shape, layer_cfgs):
    """Static planning: per-layer sizes + stride-phase moduli / plane sizes."""
    B, C, H, W = x_shape
    L = len(layer_cfgs)
    strides = [int(s) for (_, _, s, _) in layer_cfgs]
    mods = []
    for l in range(L):                       # modulus of layer l's INPUT representation
        m = 1
        for s in strides[l:]:
            m *= s
        mods.append(m)
    mods.append(1)
    plan = []
    Cin, Hin, Win = C, H, W
    for l, (w, b, s, p) in enumerate(layer_cfgs):
        Cout, _, KH, KW = w.shape
        S, P = int(s), int(p)
        assert Cout % Cin == 0, "depthwise conv needs out_channels % in_channels == 0"
        Hp, Wp = Hin + 2 * P, Win + 2 * P
        Hout = (Hp - KH) // S + 1
        Wout = (Wp - KW) // S + 1
        Mi, Mo = mods[l], mods[l + 1]
        assert Mi == S * Mo
        plan.append(dict(Cin=Cin, Cout=Cout, K=Cout // Cin, KH=KH, KW=KW, S=S, P=P,
                         Hp=Hp, Wp=Wp, Hout=Hout, Wout=Wout,
                         Mi=Mi, Mo=Mo, Uh=_cdiv(Hp, Mi), Uw=_cdiv(Wp, Mi)))
        Cin, Hin, Win = Cout, Hout, Wout
    return plan


def _phase_block(xcl, M, P, Uh, Uw):
    """(B,H,W,C) channels-last -> (B, M*Uh, M*Uw, C) stride-phase-blocked padded input:
    out[b, ph*Uh+u, pw*Uw+v, c] == x_pad[b, u*M+ph, v*M+pw, c].  Padding is fused into
    this single reshape/transpose pass (x_pad is never materialized on its own)."""
    B, H, W, C = xcl.shape
    Hp, Wp = H + 2 * P, W + 2 * P
    xp = jnp.pad(xcl, ((0, 0), (P, M * Uh - Hp + P), (P, M * Uw - Wp + P), (0, 0)))
    xp = xp.reshape(B, Uh, M, Uw, M, C)
    xp = jnp.transpose(xp, (0, 2, 1, 4, 3, 5))
    return xp.reshape(B, M * Uh, M * Uw, C)


def _tree_sum(terms):
    """Balanced-tree reduction (review micro-opt: shorten the serial add chain)."""
    while len(terms) > 1:
        nxt = [terms[i] + terms[i + 1] for i in range(0, len(terms) - 1, 2)]
        if len(terms) % 2:
            nxt.append(terms[-1])
        terms = nxt
    return terms[0]


def _make_fused_kernel(B, plan):
    L = len(plan)

    def kernel(lens_ref, x_ref, *args):
        w_refs = args[:2 * L]          # (wv_1, bv_1, wv_2, bv_2, ...)
        o_ref = args[2 * L]
        scr_refs = args[2 * L + 1:]    # one VMEM scratch per intermediate activation
        b = pl.program_id(0)

        for l, cfg in enumerate(plan):
            Cin, K, KH, KW, S = cfg['Cin'], cfg['K'], cfg['KH'], cfg['KW'], cfg['S']
            Mi, Mo, Uh, Uw = cfg['Mi'], cfg['Mo'], cfg['Uh'], cfg['Uw']
            Hout, Wout = cfg['Hout'], cfg['Wout']
            T = KH * KW
            w_ref, b_ref = w_refs[2 * l], w_refs[2 * l + 1]
            seq_len = lens_ref[l * B + b]          # length AFTER this layer (grid b!)
            is_last = (l == L - 1)

            if l == 0:
                def load_window(r0, a, c0, cc):
                    return x_ref[0, r0:r0 + a, c0:c0 + cc, :].astype(jnp.float32)
            else:
                src_ref = scr_refs[l - 1]
                def load_window(r0, a, c0, cc, _src=src_ref):
                    return _src[r0:r0 + a, c0:c0 + cc, :]

            if not is_last:
                nxt = plan[l + 1]
                scr = scr_refs[l]
                # zeros double as the next layer's zero padding + masked region
                scr[...] = jnp.zeros(scr.shape, jnp.float32)

            # per-(group, tap) weight lane-vectors, hoisted out of the phase loops
            wrow = [[w_ref[kk, t:t + 1, :] for t in range(T)] for kk in range(K)]
            brow = [b_ref[kk] for kk in range(K)]              # (1, Cin)

            # iterate the Mo x Mo output stride-phases of this layer (1x1 for the last)
            for r in range(Mo):
                A = _cdiv(Hout - r, Mo)
                for s_ in range(Mo):
                    Cc = _cdiv(Wout - s_, Mo)
                    # KH*KW shifted tap windows, unit-stride slices of the phase-blocked
                    # input, shared by all K output-channel groups (channel-vectorized).
                    wins = []
                    for kh in range(KH):
                        e = S * r + kh
                        ph, dh = e % Mi, e // Mi
                        for kw in range(KW):
                            f = S * s_ + kw
                            pw, dw = f % Mi, f // Mi
                            wins.append(load_window(ph * Uh + dh, A, pw * Uw + dw, Cc))
                    # time (last spatial axis) mask for this output phase, once per phase
                    col = jax.lax.broadcasted_iota(jnp.int32, (A, Cc, 1), 1)
                    valid = (col * Mo + s_) < seq_len

                    for kk in range(K):
                        terms = [wins[0] * wrow[kk][0] + brow[kk]]   # bias folded in tap 0
                        terms += [wins[t] * wrow[kk][t] for t in range(1, T)]
                        acc = jnp.where(valid, _tree_sum(terms), 0.0)
                        if is_last:
                            # one channels-last slab store per channel-multiplier group
                            o_ref[0, 0:A, 0:Cc, kk * Cin:(kk + 1) * Cin] = \
                                acc.astype(o_ref.dtype)
                        else:
                            # write straight into the NEXT layer's padded phase layout
                            Pn, Mn = nxt['P'], nxt['Mi']
                            Uhn, Uwn = nxt['Uh'], nxt['Uw']
                            phh, oh = (r + Pn) % Mn, (r + Pn) // Mn
                            pww, ow = (s_ + Pn) % Mn, (s_ + Pn) // Mn
                            scr[phh * Uhn + oh: phh * Uhn + oh + A,
                                pww * Uwn + ow: pww * Uwn + ow + Cc,
                                kk * Cin:(kk + 1) * Cin] = acc
    return kernel


def depthwise_conv2d_stack_forward(x, seq_lengths, layer_cfgs):
    """Fused forward of a stack of DepthwiseConv2d layers (+ per-layer time masking
    with the updated lengths).  NCHW in / NCHW out, returns (output, seq_lengths)."""
    B, C0, H, W = x.shape
    plan = _plan_layers(x.shape, layer_cfgs)
    L = len(plan)

    # ---- static channel bookkeeping: inside the kernel, channels of layer l's output
    #      are stored in "grouped" order g = kk*C_in + ci; weights are pre-permuted to
    #      match and the final output is put back in true order by one tiny gather. ----
    stored_to_true = list(range(C0))
    wvs, bvs = [], []
    for cfg, (w, bias, s, p) in zip(plan, layer_cfgs):
        K, Cin, KH, KW = cfg['K'], cfg['Cin'], cfg['KH'], cfg['KW']
        co_idx = np.array([[c_true * K + kk for c_true in stored_to_true]
                           for kk in range(K)], dtype=np.int32)        # (K, Cin)
        wv = jnp.transpose(w[co_idx.reshape(-1), 0].reshape(K, Cin, KH * KW),
                           (0, 2, 1)).astype(jnp.float32)              # (K, T, Cin)
        bv = bias[co_idx].astype(jnp.float32).reshape(K, 1, Cin)       # (K, 1, Cin)
        wvs.append(wv)
        bvs.append(bv)
        stored_to_true = [c * K + kk for kk in range(K) for c in stored_to_true]
    inv_perm = np.asarray(np.argsort(np.asarray(stored_to_true)), np.int32)

    # ---- per-layer sequence-length updates (drive the in-kernel masks) ----
    seq_lengths = seq_lengths.astype(jnp.int32)
    lens_per_layer, cur = [], seq_lengths
    for cfg in plan:
        cur = _update_lengths(cur, cfg['P'], cfg['KW'], cfg['S'])
        lens_per_layer.append(cur)
    lens_flat = jnp.concatenate(lens_per_layer, axis=0)                # (L*B,) -> SMEM

    # ---- single fused pad + phase-block prep pass (modulus = product of strides) ----
    cfg0 = plan[0]
    x_rep = _phase_block(jnp.transpose(x, (0, 2, 3, 1)),
                         cfg0['Mi'], cfg0['P'], cfg0['Uh'], cfg0['Uw'])

    last = plan[-1]
    Hf, Wf, Cf = last['Hout'], last['Wout'], last['Cout']

    in_specs = [pl.BlockSpec((1,) + x_rep.shape[1:], lambda b, lens: (b, 0, 0, 0))]
    operands = [x_rep]
    for wv, bv in zip(wvs, bvs):
        in_specs.append(pl.BlockSpec(wv.shape, lambda b, lens: (0, 0, 0)))
        in_specs.append(pl.BlockSpec(bv.shape, lambda b, lens: (0, 0, 0)))
        operands.extend([wv, bv])

    scratch_shapes = []
    for l in range(L - 1):
        nxt = plan[l + 1]
        scratch_shapes.append(pltpu.VMEM(
            (nxt['Mi'] * nxt['Uh'], nxt['Mi'] * nxt['Uw'], plan[l]['Cout']),
            jnp.float32))

    itemsize = jnp.dtype(x.dtype).itemsize
    flops = 2 * B * sum(c['Cout'] * c['KH'] * c['KW'] * c['Hout'] * c['Wout'] for c in plan)
    bytes_accessed = (int(np.prod(x_rep.shape)) * itemsize
                      + B * Hf * Wf * Cf * itemsize
                      + sum(int(np.prod(a.shape)) * 4 for a in wvs + bvs))

    out_cl = pl.pallas_call(
        _make_fused_kernel(B, plan),
        grid_spec=pltpu.PrefetchScalarGridSpec(
            num_scalar_prefetch=1,
            grid=(B,),
            in_specs=in_specs,
            out_specs=pl.BlockSpec((1, Hf, Wf, Cf), lambda b, lens: (b, 0, 0, 0)),
            scratch_shapes=scratch_shapes),
        out_shape=jax.ShapeDtypeStruct((B, Hf, Wf, Cf), x.dtype),
        compiler_params=pltpu.CompilerParams(
            dimension_semantics=("parallel",),          # megacore / 2-TC on even batch
            vmem_limit_bytes=32 * 1024 * 1024),         # explicit, fits v7x's 64 MiB
        cost_estimate=pl.CostEstimate(flops=int(flops), transcendentals=0,
                                      bytes_accessed=int(bytes_accessed)),
    )(lens_flat, *operands)

    # back to the module's NCHW layout and true channel order (tiny wrapper gather;
    # TODO(synk): fold this permutation/transpose into the consumer in production)
    out = jnp.take(jnp.transpose(out_cl, (0, 3, 1, 2)), jnp.asarray(inv_perm), axis=1)
    return out, lens_per_layer[-1]


def reference_mask_conv2d(x, seq_lengths, layer_cfgs):
    """Pure-JAX reference mirroring the PyTorch semantics (grouped conv + bias + mask)."""
    seq_lengths = seq_lengths.astype(jnp.int32)
    for (w, b, stride, padding) in layer_cfgs:
        C_in = x.shape[1]
        out = jax.lax.conv_general_dilated(
            x, w, window_strides=(stride, stride),
            padding=[(padding, padding), (padding, padding)],
            dimension_numbers=("NCHW", "OIHW", "NCHW"),
            feature_group_count=C_in)
        out = out + b.reshape(1, -1, 1, 1)
        seq_lengths = _update_lengths(seq_lengths, padding, w.shape[-1], stride)
        t = jnp.arange(out.shape[-1])
        valid = t[None, :] < seq_lengths[:, None]
        out = jnp.where(valid[:, None, None, :], out, 0.0)
        x = out
    return x, seq_lengths


if __name__ == "__main__":
    key = jax.random.PRNGKey(0)
    k_x, k_w1, k_b1, k_w2, k_b2 = jax.random.split(key, 5)

    # inputs: B x C x H(time-ish) x T, small shapes consistent with the module
    B, C0, H0, T0 = 2, 4, 16, 16
    x = jax.random.normal(k_x, (B, C0, H0, T0), jnp.float32)
    seq_lengths = jnp.array([16, 11], jnp.int32)

    # two DepthwiseConv2d layers (kernel=3, stride=2, padding=1), torch weight layout
    w1 = 0.2 * jax.random.normal(k_w1, (8, 1, 3, 3), jnp.float32)   # 4 -> 8
    b1 = 0.1 * jax.random.normal(k_b1, (8,), jnp.float32)
    w2 = 0.2 * jax.random.normal(k_w2, (16, 1, 3, 3), jnp.float32)  # 8 -> 16
    b2 = 0.1 * jax.random.normal(k_b2, (16,), jnp.float32)

    fwd = jax.jit(lambda x_, l_, w1_, b1_, w2_, b2_: depthwise_conv2d_stack_forward(
        x_, l_, [(w1_, b1_, 2, 1), (w2_, b2_, 2, 1)]))
    out, out_lens = fwd(x, seq_lengths, w1, b1, w2, b2)
    out = jax.block_until_ready(out)
    out_lens = jax.block_until_ready(out_lens)

    ref_out, ref_lens = reference_mask_conv2d(x, seq_lengths,
                                              [(w1, b1, 2, 1), (w2, b2, 2, 1)])

    assert out.shape == ref_out.shape and out.dtype == ref_out.dtype
    assert jnp.allclose(out, ref_out, atol=1e-4, rtol=1e-4), "output mismatch"
    assert bool(jnp.all(out_lens == ref_lens)), "seq_lengths mismatch"
    print("KERNEL_OK")
</pallas_src>

<mosaic_0001>
module attributes {stable_mosaic.version = 11 : i64} {
  func.func @kernel(%arg0: i32, %arg1: memref<4xi32, #tpu.memory_space<smem>>, %arg2: memref<1x20x20x4xf32, #tpu.memory_space<vmem>>, %arg3: memref<2x9x4xf32, #tpu.memory_space<vmem>>, %arg4: memref<2x1x4xf32, #tpu.memory_space<vmem>>, %arg5: memref<2x9x8xf32, #tpu.memory_space<vmem>>, %arg6: memref<2x1x8xf32, #tpu.memory_space<vmem>>, %arg7: memref<1x4x4x16xf32, #tpu.memory_space<vmem>>, %arg8: memref<10x10x8xf32, #tpu.memory_space<vmem>>) attributes {dimension_semantics = [#tpu.dimension_semantics<parallel>], iteration_bounds = array<i64: 2>, scalar_prefetch = 1 : i64, scratch_operands = 1 : i64, tpu.core_type = #tpu.core_type<tc>, window_params = [{transform_indices = @transform_0, window_bounds = array<i64: 1, 20, 20, 4>}, {pipeline_mode = #tpu.pipeline_mode<synchronous>, transform_indices = @transform_1, window_bounds = array<i64: 2, 9, 4>}, {pipeline_mode = #tpu.pipeline_mode<synchronous>, transform_indices = @transform_2, window_bounds = array<i64: 2, 1, 4>}, {pipeline_mode = #tpu.pipeline_mode<synchronous>, transform_indices = @transform_3, window_bounds = array<i64: 2, 9, 8>}, {pipeline_mode = #tpu.pipeline_mode<synchronous>, transform_indices = @transform_4, window_bounds = array<i64: 2, 1, 8>}, {transform_indices = @transform_5, window_bounds = array<i64: 1, 4, 4, 16>}]} {
    %c0_i32 = arith.constant 0 : i32
    %0 = arith.addi %c0_i32, %arg0 : i32
    %1 = arith.index_cast %0 : i32 to index
    %2 = memref.load %arg1[%1] : memref<4xi32, #tpu.memory_space<smem>>
    %cst = arith.constant 0.000000e+00 : f32
    %3 = vector.broadcast %cst : f32 to vector<10x10x8xf32>
    %c0 = arith.constant 0 : index
    %c0_0 = arith.constant 0 : index
    %c0_1 = arith.constant 0 : index
    %4 = vector.load %arg8[%c0, %c0_0, %c0_1] : memref<10x10x8xf32, #tpu.memory_space<vmem>>, vector<10x10x8xf32>
    tpu.vector_store %arg8[%c0, %c0_0, %c0_1], %3 {strides = array<i32>} : memref<10x10x8xf32, #tpu.memory_space<vmem>>, vector<10x10x8xf32>,
    %c0_2 = arith.constant 0 : index
    %c0_3 = arith.constant 0 : index
    %c0_4 = arith.constant 0 : index
    %5 = vector.load %arg3[%c0_2, %c0_3, %c0_4] : memref<2x9x4xf32, #tpu.memory_space<vmem>>, vector<1x1x4xf32>
    %6 = vector.shape_cast %5 : vector<1x1x4xf32> to vector<1x4xf32>
    %c0_5 = arith.constant 0 : index
    %c1 = arith.constant 1 : index
    %c0_6 = arith.constant 0 : index
    %7 = vector.load %arg3[%c0_5, %c1, %c0_6] : memref<2x9x4xf32, #tpu.memory_space<vmem>>, vector<1x1x4xf32>
    %8 = vector.shape_cast %7 : vector<1x1x4xf32> to vector<1x4xf32>
    %c0_7 = arith.constant 0 : index
    %c2 = arith.constant 2 : index
    %c0_8 = arith.constant 0 : index
    %9 = vector.load %arg3[%c0_7, %c2, %c0_8] : memref<2x9x4xf32, #tpu.memory_space<vmem>>, vector<1x1x4xf32>
    %10 = vector.shape_cast %9 : vector<1x1x4xf32> to vector<1x4xf32>
    %c0_9 = arith.constant 0 : index
    %c3 = arith.constant 3 : index
    %c0_10 = arith.constant 0 : index
    %11 = vector.load %arg3[%c0_9, %c3, %c0_10] : memref<2x9x4xf32, #tpu.memory_space<vmem>>, vector<1x1x4xf32>
    %12 = vector.shape_cast %11 : vector<1x1x4xf32> to vector<1x4xf32>
    %c0_11 = arith.constant 0 : index
    %c4 = arith.constant 4 : index
    %c0_12 = arith.constant 0 : index
    %13 = vector.load %arg3[%c0_11, %c4, %c0_12] : memref<2x9x4xf32, #tpu.memory_space<vmem>>, vector<1x1x4xf32>
    %14 = vector.shape_cast %13 : vector<1x1x4xf32> to vector<1x4xf32>
    %c0_13 = arith.constant 0 : index
    %c5 = arith.constant 5 : index
    %c0_14 = arith.constant 0 : index
    %15 = vector.load %arg3[%c0_13, %c5, %c0_14] : memref<2x9x4xf32, #tpu.memory_space<vmem>>, vector<1x1x4xf32>
    %16 = vector.shape_cast %15 : vector<1x1x4xf32> to vector<1x4xf32>
    %c0_15 = arith.constant 0 : index
    %c6 = arith.constant 6 : index
    %c0_16 = arith.constant 0 : index
    %17 = vector.load %arg3[%c0_15, %c6, %c0_16] : memref<2x9x4xf32, #tpu.memory_space<vmem>>, vector<1x1x4xf32>
    %18 = vector.shape_cast %17 : vector<1x1x4xf32> to vector<1x4xf32>
    %c0_17 = arith.constant 0 : index
    %c7 = arith.constant 7 : index
    %c0_18 = arith.constant 0 : index
    %19 = vector.load %arg3[%c0_17, %c7, %c0_18] : memref<2x9x4xf32, #tpu.memory_space<vmem>>, vector<1x1x4xf32>
    %20 = vector.shape_cast %19 : vector<1x1x4xf32> to vector<1x4xf32>
    %c0_19 = arith.constant 0 : index
    %c8 = arith.constant 8 : index
    %c0_20 = arith.constant 0 : index
    %21 = vector.load %arg3[%c0_19, %c8, %c0_20] : memref<2x9x4xf32, #tpu.memory_space<vmem>>, vector<1x1x4xf32>
    %22 = vector.shape_cast %21 : vector<1x1x4xf32> to vector<1x4xf32>
    %c1_21 = arith.constant 1 : index
    %c0_22 = arith.constant 0 : index
    %c0_23 = arith.constant 0 : index
    %23 = vector.load %arg3[%c1_21, %c0_22, %c0_23] : memref<2x9x4xf32, #tpu.memory_space<vmem>>, vector<1x1x4xf32>
    %24 = vector.shape_cast %23 : vector<1x1x4xf32> to vector<1x4xf32>
    %c1_24 = arith.constant 1 : index
    %c1_25 = arith.constant 1 : index
    %c0_26 = arith.constant 0 : index
    %25 = vector.load %arg3[%c1_24, %c1_25, %c0_26] : memref<2x9x4xf32, #tpu.memory_space<vmem>>, vector<1x1x4xf32>
    %26 = vector.shape_cast %25 : vector<1x1x4xf32> to vector<1x4xf32>
    %c1_27 = arith.constant 1 : index
    %c2_28 = arith.constant 2 : index
    %c0_29 = arith.constant 0 : index
    %27 = vector.load %arg3[%c1_27, %c2_28, %c0_29] : memref<2x9x4xf32, #tpu.memory_space<vmem>>, vector<1x1x4xf32>
    %28 = vector.shape_cast %27 : vector<1x1x4xf32> to vector<1x4xf32>
    %c1_30 = arith.constant 1 : index
    %c3_31 = arith.constant 3 : index
    %c0_32 = arith.constant 0 : index
    %29 = vector.load %arg3[%c1_30, %c3_31, %c0_32] : memref<2x9x4xf32, #tpu.memory_space<vmem>>, vector<1x1x4xf32>
    %30 = vector.shape_cast %29 : vector<1x1x4xf32> to vector<1x4xf32>
    %c1_33 = arith.constant 1 : index
    %c4_34 = arith.constant 4 : index
    %c0_35 = arith.constant 0 : index
    %31 = vector.load %arg3[%c1_33, %c4_34, %c0_35] : memref<2x9x4xf32, #tpu.memory_space<vmem>>, vector<1x1x4xf32>
    %32 = vector.shape_cast %31 : vector<1x1x4xf32> to vector<1x4xf32>
    %c1_36 = arith.constant 1 : index
    %c5_37 = arith.constant 5 : index
    %c0_38 = arith.constant 0 : index
    %33 = vector.load %arg3[%c1_36, %c5_37, %c0_38] : memref<2x9x4xf32, #tpu.memory_space<vmem>>, vector<1x1x4xf32>
    %34 = vector.shape_cast %33 : vector<1x1x4xf32> to vector<1x4xf32>
    %c1_39 = arith.constant 1 : index
    %c6_40 = arith.constant 6 : index
    %c0_41 = arith.constant 0 : index
    %35 = vector.load %arg3[%c1_39, %c6_40, %c0_41] : memref<2x9x4xf32, #tpu.memory_space<vmem>>, vector<1x1x4xf32>
    %36 = vector.shape_cast %35 : vector<1x1x4xf32> to vector<1x4xf32>
    %c1_42 = arith.constant 1 : index
    %c7_43 = arith.constant 7 : index
    %c0_44 = arith.constant 0 : index
    %37 = vector.load %arg3[%c1_42, %c7_43, %c0_44] : memref<2x9x4xf32, #tpu.memory_space<vmem>>, vector<1x1x4xf32>
    %38 = vector.shape_cast %37 : vector<1x1x4xf32> to vector<1x4xf32>
    %c1_45 = arith.constant 1 : index
    %c8_46 = arith.constant 8 : index
    %c0_47 = arith.constant 0 : index
    %39 = vector.load %arg3[%c1_45, %c8_46, %c0_47] : memref<2x9x4xf32, #tpu.memory_space<vmem>>, vector<1x1x4xf32>
    %40 = vector.shape_cast %39 : vector<1x1x4xf32> to vector<1x4xf32>
    %c0_48 = arith.constant 0 : index
    %c0_49 = arith.constant 0 : index
    %c0_50 = arith.constant 0 : index
    %41 = vector.load %arg4[%c0_48, %c0_49, %c0_50] : memref<2x1x4xf32, #tpu.memory_space<vmem>>, vector<1x1x4xf32>
    %42 = vector.shape_cast %41 : vector<1x1x4xf32> to vector<1x4xf32>
    %c1_51 = arith.constant 1 : index
    %c0_52 = arith.constant 0 : index
    %c0_53 = arith.constant 0 : index
    %43 = vector.load %arg4[%c1_51, %c0_52, %c0_53] : memref<2x1x4xf32, #tpu.memory_space<vmem>>, vector<1x1x4xf32>
    %44 = vector.shape_cast %43 : vector<1x1x4xf32> to vector<1x4xf32>
    %c0_54 = arith.constant 0 : index
    %c0_55 = arith.constant 0 : index
    %c0_56 = arith.constant 0 : index
    %c0_57 = arith.constant 0 : index
    %45 = vector.load %arg2[%c0_54, %c0_55, %c0_56, %c0_57] : memref<1x20x20x4xf32, #tpu.memory_space<vmem>>, vector<1x4x4x4xf32>
    %46 = vector.shape_cast %45 : vector<1x4x4x4xf32> to vector<4x4x4xf32>
    %c0_58 = arith.constant 0 : index
    %c0_59 = arith.constant 0 : index
    %c5_60 = arith.constant 5 : index
    %c0_61 = arith.constant 0 : index
    %47 = vector.load %arg2[%c0_58, %c0_59, %c5_60, %c0_61] : memref<1x20x20x4xf32, #tpu.memory_space<vmem>>, vector<1x4x4x4xf32>
    %48 = vector.shape_cast %47 : vector<1x4x4x4xf32> to vector<4x4x4xf32>
    %c0_62 = arith.constant 0 : index
    %c0_63 = arith.constant 0 : index
    %c10 = arith.constant 10 : index
    %c0_64 = arith.constant 0 : index
    %49 = vector.load %arg2[%c0_62, %c0_63, %c10, %c0_64] : memref<1x20x20x4xf32, #tpu.memory_space<vmem>>, vector<1x4x4x4xf32>
    %50 = vector.shape_cast %49 : vector<1x4x4x4xf32> to vector<4x4x4xf32>
    %c0_65 = arith.constant 0 : index
    %c5_66 = arith.constant 5 : index
    %c0_67 = arith.constant 0 : index
    %c0_68 = arith.constant 0 : index
    %51 = vector.load %arg2[%c0_65, %c5_66, %c0_67, %c0_68] : memref<1x20x20x4xf32, #tpu.memory_space<vmem>>, vector<1x4x4x4xf32>
    %52 = vector.shape_cast %51 : vector<1x4x4x4xf32> to vector<4x4x4xf32>
    %c0_69 = arith.constant 0 : index
    %c5_70 = arith.constant 5 : index
    %c5_71 = arith.constant 5 : index
    %c0_72 = arith.constant 0 : index
    %53 = vector.load %arg2[%c0_69, %c5_70, %c5_71, %c0_72] : memref<1x20x20x4xf32, #tpu.memory_space<vmem>>, vector<1x4x4x4xf32>
    %54 = vector.shape_cast %53 : vector<1x4x4x4xf32> to vector<4x4x4xf32>
    %c0_73 = arith.constant 0 : index
    %c5_74 = arith.constant 5 : index
    %c10_75 = arith.constant 10 : index
    %c0_76 = arith.constant 0 : index
    %55 = vector.load %arg2[%c0_73, %c5_74, %c10_75, %c0_76] : memref<1x20x20x4xf32, #tpu.memory_space<vmem>>, vector<1x4x4x4xf32>
    %56 = vector.shape_cast %55 : vector<1x4x4x4xf32> to vector<4x4x4xf32>
    %c0_77 = arith.constant 0 : index
    %c10_78 = arith.constant 10 : index
    %c0_79 = arith.constant 0 : index
    %c0_80 = arith.constant 0 : index
    %57 = vector.load %arg2[%c0_77, %c10_78, %c0_79, %c0_80] : memref<1x20x20x4xf32, #tpu.memory_space<vmem>>, vector<1x4x4x4xf32>
    %58 = vector.shape_cast %57 : vector<1x4x4x4xf32> to vector<4x4x4xf32>
    %c0_81 = arith.constant 0 : index
    %c10_82 = arith.constant 10 : index
    %c5_83 = arith.constant 5 : index
    %c0_84 = arith.constant 0 : index
    %59 = vector.load %arg2[%c0_81, %c10_82, %c5_83, %c0_84] : memref<1x20x20x4xf32, #tpu.memory_space<vmem>>, vector<1x4x4x4xf32>
    %60 = vector.shape_cast %59 : vector<1x4x4x4xf32> to vector<4x4x4xf32>
    %c0_85 = arith.constant 0 : index
    %c10_86 = arith.constant 10 : index
    %c10_87 = arith.constant 10 : index
    %c0_88 = arith.constant 0 : index
    %61 = vector.load %arg2[%c0_85, %c10_86, %c10_87, %c0_88] : memref<1x20x20x4xf32, #tpu.memory_space<vmem>>, vector<1x4x4x4xf32>
    %62 = vector.shape_cast %61 : vector<1x4x4x4xf32> to vector<4x4x4xf32>
    %63 = tpu.iota {dimensions = array<i32: 1>} : vector<4x4x1xi32>
    %c2_i32 = arith.constant 2 : i32
    %64 = vector.broadcast %c2_i32 : i32 to vector<4x4x1xi32>
    %65 = arith.muli %63, %64 : vector<4x4x1xi32>
    %c0_i32_89 = arith.constant 0 : i32
    %66 = vector.broadcast %c0_i32_89 : i32 to vector<4x4x1xi32>
    %67 = arith.addi %65, %66 : vector<4x4x1xi32>
    %68 = vector.broadcast %2 : i32 to vector<4x4x1xi32>
    %69 = arith.cmpi slt, %67, %68 : vector<4x4x1xi32>
    %70 = vector.shape_cast %6 : vector<1x4xf32> to vector<1x1x4xf32>
    %71 = vector.broadcast %70 : vector<1x1x4xf32> to vector<4x4x4xf32>
    %72 = arith.mulf %46, %71 : vector<4x4x4xf32>
    %73 = vector.shape_cast %42 : vector<1x4xf32> to vector<1x1x4xf32>
    %74 = vector.broadcast %73 : vector<1x1x4xf32> to vector<4x4x4xf32>
    %75 = arith.addf %72, %74 : vector<4x4x4xf32>
    %76 = vector.shape_cast %8 : vector<1x4xf32> to vector<1x1x4xf32>
    %77 = vector.broadcast %76 : vector<1x1x4xf32> to vector<4x4x4xf32>
    %78 = arith.mulf %48, %77 : vector<4x4x4xf32>
    %79 = vector.shape_cast %10 : vector<1x4xf32> to vector<1x1x4xf32>
    %80 = vector.broadcast %79 : vector<1x1x4xf32> to vector<4x4x4xf32>
    %81 = arith.mulf %50, %80 : vector<4x4x4xf32>
    %82 = vector.shape_cast %12 : vector<1x4xf32> to vector<1x1x4xf32>
    %83 = vector.broadcast %82 : vector<1x1x4xf32> to vector<4x4x4xf32>
    %84 = arith.mulf %52, %83 : vector<4x4x4xf32>
    %85 = vector.shape_cast %14 : vector<1x4xf32> to vector<1x1x4xf32>
    %86 = vector.broadcast %85 : vector<1x1x4xf32> to vector<4x4x4xf32>
    %87 = arith.mulf %54, %86 : vector<4x4x4xf32>
    %88 = vector.shape_cast %16 : vector<1x4xf32> to vector<1x1x4xf32>
    %89 = vector.broadcast %88 : vector<1x1x4xf32> to vector<4x4x4xf32>
    %90 = arith.mulf %56, %89 : vector<4x4x4xf32>
    %91 = vector.shape_cast %18 : vector<1x4xf32> to vector<1x1x4xf32>
    %92 = vector.broadcast %91 : vector<1x1x4xf32> to vector<4x4x4xf32>
    %93 = arith.mulf %58, %92 : vector<4x4x4xf32>
    %94 = vector.shape_cast %20 : vector<1x4xf32> to vector<1x1x4xf32>
    %95 = vector.broadcast %94 : vector<1x1x4xf32> to vector<4x4x4xf32>
    %96 = arith.mulf %60, %95 : vector<4x4x4xf32>
    %97 = vector.shape_cast %22 : vector<1x4xf32> to vector<1x1x4xf32>
    %98 = vector.broadcast %97 : vector<1x1x4xf32> to vector<4x4x4xf32>
    %99 = arith.mulf %62, %98 : vector<4x4x4xf32>
    %100 = arith.addf %75, %78 : vector<4x4x4xf32>
    %101 = arith.addf %81, %84 : vector<4x4x4xf32>
    %102 = arith.addf %87, %90 : vector<4x4x4xf32>
    %103 = arith.addf %93, %96 : vector<4x4x4xf32>
    %104 = arith.addf %100, %101 : vector<4x4x4xf32>
    %105 = arith.addf %102, %103 : vector<4x4x4xf32>
    %106 = arith.addf %104, %105 : vector<4x4x4xf32>
    %107 = arith.addf %106, %99 : vector<4x4x4xf32>
    %cst_90 = arith.constant 0.000000e+00 : f32
    %108 = vector.shape_cast %69 : vector<4x4x1xi1> to vector<4x4x1xi1>
    %109 = vector.broadcast %108 : vector<4x4x1xi1> to vector<4x4x4xi1>
    %110 = vector.broadcast %cst_90 : f32 to vector<4x4x4xf32>
    %111 = arith.select %109, %107, %110 : vector<4x4x4xi1>, vector<4x4x4xf32>
    %c5_91 = arith.constant 5 : index
    %c5_92 = arith.constant 5 : index
    %c0_93 = arith.constant 0 : index
    %112 = vector.load %arg8[%c5_91, %c5_92, %c0_93] : memref<10x10x8xf32, #tpu.memory_space<vmem>>, vector<4x4x4xf32>
    tpu.vector_store %arg8[%c5_91, %c5_92, %c0_93], %111 {strides = array<i32>} : memref<10x10x8xf32, #tpu.memory_space<vmem>>, vector<4x4x4xf32>,
    %113 = vector.shape_cast %24 : vector<1x4xf32> to vector<1x1x4xf32>
    %114 = vector.broadcast %113 : vector<1x1x4xf32> to vector<4x4x4xf32>
    %115 = arith.mulf %46, %114 : vector<4x4x4xf32>
    %116 = vector.shape_cast %44 : vector<1x4xf32> to vector<1x1x4xf32>
    %117 = vector.broadcast %116 : vector<1x1x4xf32> to vector<4x4x4xf32>
    %118 = arith.addf %115, %117 : vector<4x4x4xf32>
    %119 = vector.shape_cast %26 : vector<1x4xf32> to vector<1x1x4xf32>
    %120 = vector.broadcast %119 : vector<1x1x4xf32> to vector<4x4x4xf32>
    %121 = arith.mulf %48, %120 : vector<4x4x4xf32>
    %122 = vector.shape_cast %28 : vector<1x4xf32> to vector<1x1x4xf32>
    %123 = vector.broadcast %122 : vector<1x1x4xf32> to vector<4x4x4xf32>
    %124 = arith.mulf %50, %123 : vector<4x4x4xf32>
    %125 = vector.shape_cast %30 : vector<1x4xf32> to vector<1x1x4xf32>
    %126 = vector.broadcast %125 : vector<1x1x4xf32> to vector<4x4x4xf32>
    %127 = arith.mulf %52, %126 : vector<4x4x4xf32>
    %128 = vector.shape_cast %32 : vector<1x4xf32> to vector<1x1x4xf32>
    %129 = vector.broadcast %128 : vector<1x1x4xf32> to vector<4x4x4xf32>
    %130 = arith.mulf %54, %129 : vector<4x4x4xf32>
    %131 = vector.shape_cast %34 : vector<1x4xf32> to vector<1x1x4xf32>
    %132 = vector.broadcast %131 : vector<1x1x4xf32> to vector<4x4x4xf32>
    %133 = arith.mulf %56, %132 : vector<4x4x4xf32>
    %134 = vector.shape_cast %36 : vector<1x4xf32> to vector<1x1x4xf32>
    %135 = vector.broadcast %134 : vector<1x1x4xf32> to vector<4x4x4xf32>
    %136 = arith.mulf %58, %135 : vector<4x4x4xf32>
    %137 = vector.shape_cast %38 : vector<1x4xf32> to vector<1x1x4xf32>
    %138 = vector.broadcast %137 : vector<1x1x4xf32> to vector<4x4x4xf32>
    %139 = arith.mulf %60, %138 : vector<4x4x4xf32>
    %140 = vector.shape_cast %40 : vector<1x4xf32> to vector<1x1x4xf32>
    %141 = vector.broadcast %140 : vector<1x1x4xf32> to vector<4x4x4xf32>
    %142 = arith.mulf %62, %141 : vector<4x4x4xf32>
    %143 = arith.addf %118, %121 : vector<4x4x4xf32>
    %144 = arith.addf %124, %127 : vector<4x4x4xf32>
    %145 = arith.addf %130, %133 : vector<4x4x4xf32>
    %146 = arith.addf %136, %139 : vector<4x4x4xf32>
    %147 = arith.addf %143, %144 : vector<4x4x4xf32>
    %148 = arith.addf %145, %146 : vector<4x4x4xf32>
    %149 = arith.addf %147, %148 : vector<4x4x4xf32>
    %150 = arith.addf %149, %142 : vector<4x4x4xf32>
    %cst_94 = arith.constant 0.000000e+00 : f32
    %151 = vector.shape_cast %69 : vector<4x4x1xi1> to vector<4x4x1xi1>
    %152 = vector.broadcast %151 : vector<4x4x1xi1> to vector<4x4x4xi1>
    %153 = vector.broadcast %cst_94 : f32 to vector<4x4x4xf32>
    %154 = arith.select %152, %150, %153 : vector<4x4x4xi1>, vector<4x4x4xf32>
    %c5_95 = arith.constant 5 : index
    %c5_96 = arith.constant 5 : index
    %c4_97 = arith.constant 4 : index
    %155 = vector.load %arg8[%c5_95, %c5_96, %c4_97] : memref<10x10x8xf32, #tpu.memory_space<vmem>>, vector<4x4x4xf32>
    tpu.vector_store %arg8[%c5_95, %c5_96, %c4_97], %154 {strides = array<i32>} : memref<10x10x8xf32, #tpu.memory_space<vmem>>, vector<4x4x4xf32>,
    %c0_98 = arith.constant 0 : index
    %c0_99 = arith.constant 0 : index
    %c10_100 = arith.constant 10 : index
    %c0_101 = arith.constant 0 : index
    %156 = vector.load %arg2[%c0_98, %c0_99, %c10_100, %c0_101] : memref<1x20x20x4xf32, #tpu.memory_space<vmem>>, vector<1x4x4x4xf32>
    %157 = vector.shape_cast %156 : vector<1x4x4x4xf32> to vector<4x4x4xf32>
    %c0_102 = arith.constant 0 : index
    %c0_103 = arith.constant 0 : index
    %c15 = arith.constant 15 : index
    %c0_104 = arith.constant 0 : index
    %158 = vector.load %arg2[%c0_102, %c0_103, %c15, %c0_104] : memref<1x20x20x4xf32, #tpu.memory_space<vmem>>, vector<1x4x4x4xf32>
    %159 = vector.shape_cast %158 : vector<1x4x4x4xf32> to vector<4x4x4xf32>
    %c0_105 = arith.constant 0 : index
    %c0_106 = arith.constant 0 : index
    %c1_107 = arith.constant 1 : index
    %c0_108 = arith.constant 0 : index
    %160 = vector.load %arg2[%c0_105, %c0_106, %c1_107, %c0_108] : memref<1x20x20x4xf32, #tpu.memory_space<vmem>>, vector<1x4x4x4xf32>
    %161 = vector.shape_cast %160 : vector<1x4x4x4xf32> to vector<4x4x4xf32>
    %c0_109 = arith.constant 0 : index
    %c5_110 = arith.constant 5 : index
    %c10_111 = arith.constant 10 : index
    %c0_112 = arith.constant 0 : index
    %162 = vector.load %arg2[%c0_109, %c5_110, %c10_111, %c0_112] : memref<1x20x20x4xf32, #tpu.memory_space<vmem>>, vector<1x4x4x4xf32>
    %163 = vector.shape_cast %162 : vector<1x4x4x4xf32> to vector<4x4x4xf32>
    %c0_113 = arith.constant 0 : index
    %c5_114 = arith.constant 5 : index
    %c15_115 = arith.constant 15 : index
    %c0_116 = arith.constant 0 : index
    %164 = vector.load %arg2[%c0_113, %c5_114, %c15_115, %c0_116] : memref<1x20x20x4xf32, #tpu.memory_space<vmem>>, vector<1x4x4x4xf32>
    %165 = vector.shape_cast %164 : vector<1x4x4x4xf32> to vector<4x4x4xf32>
    %c0_117 = arith.constant 0 : index
    %c5_118 = arith.constant 5 : index
    %c1_119 = arith.constant 1 : index
    %c0_120 = arith.constant 0 : index
    %166 = vector.load %arg2[%c0_117, %c5_118, %c1_119, %c0_120] : memref<1x20x20x4xf32, #tpu.memory_space<vmem>>, vector<1x4x4x4xf32>
    %167 = vector.shape_cast %166 : vector<1x4x4x4xf32> to vector<4x4x4xf32>
    %c0_121 = arith.constant 0 : index
    %c10_122 = arith.constant 10 : index
    %c10_123 = arith.constant 10 : index
    %c0_124 = arith.constant 0 : index
    %168 = vector.load %arg2[%c0_121, %c10_122, %c10_123, %c0_124] : memref<1x20x20x4xf32, #tpu.memory_space<vmem>>, vector<1x4x4x4xf32>
    %169 = vector.shape_cast %168 : vector<1x4x4x4xf32> to vector<4x4x4xf32>
    %c0_125 = arith.constant 0 : index
    %c10_126 = arith.constant 10 : index
    %c15_127 = arith.constant 15 : index
    %c0_128 = arith.constant 0 : index
    %170 = vector.load %arg2[%c0_125, %c10_126, %c15_127, %c0_128] : memref<1x20x20x4xf32, #tpu.memory_space<vmem>>, vector<1x4x4x4xf32>
    %171 = vector.shape_cast %170 : vector<1x4x4x4xf32> to vector<4x4x4xf32>
    %c0_129 = arith.constant 0 : index
    %c10_130 = arith.constant 10 : index
    %c1_131 = arith.constant 1 : index
    %c0_132 = arith.constant 0 : index
    %172 = vector.load %arg2[%c0_129, %c10_130, %c1_131, %c0_132] : memref<1x20x20x4xf32, #tpu.memory_space<vmem>>, vector<1x4x4x4xf32>
    %173 = vector.shape_cast %172 : vector<1x4x4x4xf32> to vector<4x4x4xf32>
    %174 = tpu.iota {dimensions = array<i32: 1>} : vector<4x4x1xi32>
    %c2_i32_133 = arith.constant 2 : i32
    %175 = vector.broadcast %c2_i32_133 : i32 to vector<4x4x1xi32>
    %176 = arith.muli %174, %175 : vector<4x4x1xi32>
    %c1_i32 = arith.constant 1 : i32
    %177 = vector.broadcast %c1_i32 : i32 to vector<4x4x1xi32>
    %178 = arith.addi %176, %177 : vector<4x4x1xi32>
    %179 = vector.broadcast %2 : i32 to vector<4x4x1xi32>
    %180 = arith.cmpi slt, %178, %179 : vector<4x4x1xi32>
    %181 = vector.shape_cast %6 : vector<1x4xf32> to vector<1x1x4xf32>
    %182 = vector.broadcast %181 : vector<1x1x4xf32> to vector<4x4x4xf32>
    %183 = arith.mulf %157, %182 : vector<4x4x4xf32>
    %184 = vector.shape_cast %42 : vector<1x4xf32> to vector<1x1x4xf32>
    %185 = vector.broadcast %184 : vector<1x1x4xf32> to vector<4x4x4xf32>
    %186 = arith.addf %183, %185 : vector<4x4x4xf32>
    %187 = vector.shape_cast %8 : vector<1x4xf32> to vector<1x1x4xf32>
    %188 = vector.broadcast %187 : vector<1x1x4xf32> to vector<4x4x4xf32>
    %189 = arith.mulf %159, %188 : vector<4x4x4xf32>
    %190 = vector.shape_cast %10 : vector<1x4xf32> to vector<1x1x4xf32>
    %191 = vector.broadcast %190 : vector<1x1x4xf32> to vector<4x4x4xf32>
    %192 = arith.mulf %161, %191 : vector<4x4x4xf32>
    %193 = vector.shape_cast %12 : vector<1x4xf32> to vector<1x1x4xf32>
    %194 = vector.broadcast %193 : vector<1x1x4xf32> to vector<4x4x4xf32>
    %195 = arith.mulf %163, %194 : vector<4x4x4xf32>
    %196 = vector.shape_cast %14 : vector<1x4xf32> to vector<1x1x4xf32>
    %197 = vector.broadcast %196 : vector<1x1x4xf32> to vector<4x4x4xf32>
    %198 = arith.mulf %165, %197 : vector<4x4x4xf32>
    %199 = vector.shape_cast %16 : vector<1x4xf32> to vector<1x1x4xf32>
    %200 = vector.broadcast %199 : vector<1x1x4xf32> to vector<4x4x4xf32>
    %201 = arith.mulf %167, %200 : vector<4x4x4xf32>
    %202 = vector.shape_cast %18 : vector<1x4xf32> to vector<1x1x4xf32>
    %203 = vector.broadcast %202 : vector<1x1x4xf32> to vector<4x4x4xf32>
    %204 = arith.mulf %169, %203 : vector<4x4x4xf32>
    %205 = vector.shape_cast %20 : vector<1x4xf32> to vector<1x1x4xf32>
    %206 = vector.broadcast %205 : vector<1x1x4xf32> to vector<4x4x4xf32>
    %207 = arith.mulf %171, %206 : vector<4x4x4xf32>
    %208 = vector.shape_cast %22 : vector<1x4xf32> to vector<1x1x4xf32>
    %209 = vector.broadcast %208 : vector<1x1x4xf32> to vector<4x4x4xf32>
    %210 = arith.mulf %173, %209 : vector<4x4x4xf32>
    %211 = arith.addf %186, %189 : vector<4x4x4xf32>
    %212 = arith.addf %192, %195 : vector<4x4x4xf32>
    %213 = arith.addf %198, %201 : vector<4x4x4xf32>
    %214 = arith.addf %204, %207 : vector<4x4x4xf32>
    %215 = arith.addf %211, %212 : vector<4x4x4xf32>
    %216 = arith.addf %213, %214 : vector<4x4x4xf32>
    %217 = arith.addf %215, %216 : vector<4x4x4xf32>
    %218 = arith.addf %217, %210 : vector<4x4x4xf32>
    %cst_134 = arith.constant 0.000000e+00 : f32
    %219 = vector.shape_cast %180 : vector<4x4x1xi1> to vector<4x4x1xi1>
    %220 = vector.broadcast %219 : vector<4x4x1xi1> to vector<4x4x4xi1>
    %221 = vector.broadcast %cst_134 : f32 to vector<4x4x4xf32>
    %222 = arith.select %220, %218, %221 : vector<4x4x4xi1>, vector<4x4x4xf32>
    %c5_135 = arith.constant 5 : index
    %c1_136 = arith.constant 1 : index
    %c0_137 = arith.constant 0 : index
    %223 = vector.load %arg8[%c5_135, %c1_136, %c0_137] : memref<10x10x8xf32, #tpu.memory_space<vmem>>, vector<4x4x4xf32>
    tpu.vector_store %arg8[%c5_135, %c1_136, %c0_137], %222 {strides = array<i32>} : memref<10x10x8xf32, #tpu.memory_space<vmem>>, vector<4x4x4xf32>,
    %224 = vector.shape_cast %24 : vector<1x4xf32> to vector<1x1x4xf32>
    %225 = vector.broadcast %224 : vector<1x1x4xf32> to vector<4x4x4xf32>
    %226 = arith.mulf %157, %225 : vector<4x4x4xf32>
    %227 = vector.shape_cast %44 : vector<1x4xf32> to vector<1x1x4xf32>
    %228 = vector.broadcast %227 : vector<1x1x4xf32> to vector<4x4x4xf32>
    %229 = arith.addf %226, %228 : vector<4x4x4xf32>
    %230 = vector.shape_cast %26 : vector<1x4xf32> to vector<1x1x4xf32>
    %231 = vector.broadcast %230 : vector<1x1x4xf32> to vector<4x4x4xf32>
    %232 = arith.mulf %159, %231 : vector<4x4x4xf32>
    %233 = vector.shape_cast %28 : vector<1x4xf32> to vector<1x1x4xf32>
    %234 = vector.broadcast %233 : vector<1x1x4xf32> to vector<4x4x4xf32>
    %235 = arith.mulf %161, %234 : vector<4x4x4xf32>
    %236 = vector.shape_cast %30 : vector<1x4xf32> to vector<1x1x4xf32>
    %237 = vector.broadcast %236 : vector<1x1x4xf32> to vector<4x4x4xf32>
    %238 = arith.mulf %163, %237 : vector<4x4x4xf32>
    %239 = vector.shape_cast %32 : vector<1x4xf32> to vector<1x1x4xf32>
    %240 = vector.broadcast %239 : vector<1x1x4xf32> to vector<4x4x4xf32>
    %241 = arith.mulf %165, %240 : vector<4x4x4xf32>
    %242 = vector.shape_cast %34 : vector<1x4xf32> to vector<1x1x4xf32>
    %243 = vector.broadcast %242 : vector<1x1x4xf32> to vector<4x4x4xf32>
    %244 = arith.mulf %167, %243 : vector<4x4x4xf32>
    %245 = vector.shape_cast %36 : vector<1x4xf32> to vector<1x1x4xf32>
    %246 = vector.broadcast %245 : vector<1x1x4xf32> to vector<4x4x4xf32>
    %247 = arith.mulf %169, %246 : vector<4x4x4xf32>
    %248 = vector.shape_cast %38 : vector<1x4xf32> to vector<1x1x4xf32>
    %249 = vector.broadcast %248 : vector<1x1x4xf32> to vector<4x4x4xf32>
    %250 = arith.mulf %171, %249 : vector<4x4x4xf32>
    %251 = vector.shape_cast %40 : vector<1x4xf32> to vector<1x1x4xf32>
    %252 = vector.broadcast %251 : vector<1x1x4xf32> to vector<4x4x4xf32>
    %253 = arith.mulf %173, %252 : vector<4x4x4xf32>
    %254 = arith.addf %229, %232 : vector<4x4x4xf32>
    %255 = arith.addf %235, %238 : vector<4x4x4xf32>
    %256 = arith.addf %241, %244 : vector<4x4x4xf32>
    %257 = arith.addf %247, %250 : vector<4x4x4xf32>
    %258 = arith.addf %254, %255 : vector<4x4x4xf32>
    %259 = arith.addf %256, %257 : vector<4x4x4xf32>
    %260 = arith.addf %258, %259 : vector<4x4x4xf32>
    %261 = arith.addf %260, %253 : vector<4x4x4xf32>
    %cst_138 = arith.constant 0.000000e+00 : f32
    %262 = vector.shape_cast %180 : vector<4x4x1xi1> to vector<4x4x1xi1>
    %263 = vector.broadcast %262 : vector<4x4x1xi1> to vector<4x4x4xi1>
    %264 = vector.broadcast %cst_138 : f32 to vector<4x4x4xf32>
    %265 = arith.select %263, %261, %264 : vector<4x4x4xi1>, vector<4x4x4xf32>
    %c5_139 = arith.constant 5 : index
    %c1_140 = arith.constant 1 : index
    %c4_141 = arith.constant 4 : index
    %266 = vector.load %arg8[%c5_139, %c1_140, %c4_141] : memref<10x10x8xf32, #tpu.memory_space<vmem>>, vector<4x4x4xf32>
    tpu.vector_store %arg8[%c5_139, %c1_140, %c4_141], %265 {strides = array<i32>} : memref<10x10x8xf32, #tpu.memory_space<vmem>>, vector<4x4x4xf32>,
    %c0_142 = arith.constant 0 : index
    %c10_143 = arith.constant 10 : index
    %c0_144 = arith.constant 0 : index
    %c0_145 = arith.constant 0 : index
    %267 = vector.load %arg2[%c0_142, %c10_143, %c0_144, %c0_145] : memref<1x20x20x4xf32, #tpu.memory_space<vmem>>, vector<1x4x4x4xf32>
    %268 = vector.shape_cast %267 : vector<1x4x4x4xf32> to vector<4x4x4xf32>
    %c0_146 = arith.constant 0 : index
    %c10_147 = arith.constant 10 : index
    %c5_148 = arith.constant 5 : index
    %c0_149 = arith.constant 0 : index
    %269 = vector.load %arg2[%c0_146, %c10_147, %c5_148, %c0_149] : memref<1x20x20x4xf32, #tpu.memory_space<vmem>>, vector<1x4x4x4xf32>
    %270 = vector.shape_cast %269 : vector<1x4x4x4xf32> to vector<4x4x4xf32>
    %c0_150 = arith.constant 0 : index
    %c10_151 = arith.constant 10 : index
    %c10_152 = arith.constant 10 : index
    %c0_153 = arith.constant 0 : index
    %271 = vector.load %arg2[%c0_150, %c10_151, %c10_152, %c0_153] : memref<1x20x20x4xf32, #tpu.memory_space<vmem>>, vector<1x4x4x4xf32>
    %272 = vector.shape_cast %271 : vector<1x4x4x4xf32> to vector<4x4x4xf32>
    %c0_154 = arith.constant 0 : index
    %c15_155 = arith.constant 15 : index
    %c0_156 = arith.constant 0 : index
    %c0_157 = arith.constant 0 : index
    %273 = vector.load %arg2[%c0_154, %c15_155, %c0_156, %c0_157] : memref<1x20x20x4xf32, #tpu.memory_space<vmem>>, vector<1x4x4x4xf32>
    %274 = vector.shape_cast %273 : vector<1x4x4x4xf32> to vector<4x4x4xf32>
    %c0_158 = arith.constant 0 : index
    %c15_159 = arith.constant 15 : index
    %c5_160 = arith.constant 5 : index
    %c0_161 = arith.constant 0 : index
    %275 = vector.load %arg2[%c0_158, %c15_159, %c5_160, %c0_161] : memref<1x20x20x4xf32, #tpu.memory_space<vmem>>, vector<1x4x4x4xf32>
    %276 = vector.shape_cast %275 : vector<1x4x4x4xf32> to vector<4x4x4xf32>
    %c0_162 = arith.constant 0 : index
    %c15_163 = arith.constant 15 : index
    %c10_164 = arith.constant 10 : index
    %c0_165 = arith.constant 0 : index
    %277 = vector.load %arg2[%c0_162, %c15_163, %c10_164, %c0_165] : memref<1x20x20x4xf32, #tpu.memory_space<vmem>>, vector<1x4x4x4xf32>
    %278 = vector.shape_cast %277 : vector<1x4x4x4xf32> to vector<4x4x4xf32>
    %c0_166 = arith.constant 0 : index
    %c1_167 = arith.constant 1 : index
    %c0_168 = arith.constant 0 : index
    %c0_169 = arith.constant 0 : index
    %279 = vector.load %arg2[%c0_166, %c1_167, %c0_168, %c0_169] : memref<1x20x20x4xf32, #tpu.memory_space<vmem>>, vector<1x4x4x4xf32>
    %280 = vector.shape_cast %279 : vector<1x4x4x4xf32> to vector<4x4x4xf32>
    %c0_170 = arith.constant 0 : index
    %c1_171 = arith.constant 1 : index
    %c5_172 = arith.constant 5 : index
    %c0_173 = arith.constant 0 : index
    %281 = vector.load %arg2[%c0_170, %c1_171, %c5_172, %c0_173] : memref<1x20x20x4xf32, #tpu.memory_space<vmem>>, vector<1x4x4x4xf32>
    %282 = vector.shape_cast %281 : vector<1x4x4x4xf32> to vector<4x4x4xf32>
    %c0_174 = arith.constant 0 : index
    %c1_175 = arith.constant 1 : index
    %c10_176 = arith.constant 10 : index
    %c0_177 = arith.constant 0 : index
    %283 = vector.load %arg2[%c0_174, %c1_175, %c10_176, %c0_177] : memref<1x20x20x4xf32, #tpu.memory_space<vmem>>, vector<1x4x4x4xf32>
    %284 = vector.shape_cast %283 : vector<1x4x4x4xf32> to vector<4x4x4xf32>
    %285 = tpu.iota {dimensions = array<i32: 1>} : vector<4x4x1xi32>
    %c2_i32_178 = arith.constant 2 : i32
    %286 = vector.broadcast %c2_i32_178 : i32 to vector<4x4x1xi32>
    %287 = arith.muli %285, %286 : vector<4x4x1xi32>
    %c0_i32_179 = arith.constant 0 : i32
    %288 = vector.broadcast %c0_i32_179 : i32 to vector<4x4x1xi32>
    %289 = arith.addi %287, %288 : vector<4x4x1xi32>
    %290 = vector.broadcast %2 : i32 to vector<4x4x1xi32>
    %291 = arith.cmpi slt, %289, %290 : vector<4x4x1xi32>
    %292 = vector.shape_cast %6 : vector<1x4xf32> to vector<1x1x4xf32>
    %293 = vector.broadcast %292 : vector<1x1x4xf32> to vector<4x4x4xf32>
    %294 = arith.mulf %268, %293 : vector<4x4x4xf32>
    %295 = vector.shape_cast %42 : vector<1x4xf32> to vector<1x1x4xf32>
    %296 = vector.broadcast %295 : vector<1x1x4xf32> to vector<4x4x4xf32>
    %297 = arith.addf %294, %296 : vector<4x4x4xf32>
    %298 = vector.shape_cast %8 : vector<1x4xf32> to vector<1x1x4xf32>
    %299 = vector.broadcast %298 : vector<1x1x4xf32> to vector<4x4x4xf32>
    %300 = arith.mulf %270, %299 : vector<4x4x4xf32>
    %301 = vector.shape_cast %10 : vector<1x4xf32> to vector<1x1x4xf32>
    %302 = vector.broadcast %301 : vector<1x1x4xf32> to vector<4x4x4xf32>
    %303 = arith.mulf %272, %302 : vector<4x4x4xf32>
    %304 = vector.shape_cast %12 : vector<1x4xf32> to vector<1x1x4xf32>
    %305 = vector.broadcast %304 : vector<1x1x4xf32> to vector<4x4x4xf32>
    %306 = arith.mulf %274, %305 : vector<4x4x4xf32>
    %307 = vector.shape_cast %14 : vector<1x4xf32> to vector<1x1x4xf32>
    %308 = vector.broadcast %307 : vector<1x1x4xf32> to vector<4x4x4xf32>
    %309 = arith.mulf %276, %308 : vector<4x4x4xf32>
    %310 = vector.shape_cast %16 : vector<1x4xf32> to vector<1x1x4xf32>
    %311 = vector.broadcast %310 : vector<1x1x4xf32> to vector<4x4x4xf32>
    %312 = arith.mulf %278, %311 : vector<4x4x4xf32>
    %313 = vector.shape_cast %18 : vector<1x4xf32> to vector<1x1x4xf32>
    %314 = vector.broadcast %313 : vector<1x1x4xf32> to vector<4x4x4xf32>
    %315 = arith.mulf %280, %314 : vector<4x4x4xf32>
    %316 = vector.shape_cast %20 : vector<1x4xf32> to vector<1x1x4xf32>
    %317 = vector.broadcast %316 : vector<1x1x4xf32> to vector<4x4x4xf32>
    %318 = arith.mulf %282, %317 : vector<4x4x4xf32>
    %319 = vector.shape_cast %22 : vector<1x4xf32> to vector<1x1x4xf32>
    %320 = vector.broadcast %319 : vector<1x1x4xf32> to vector<4x4x4xf32>
    %321 = arith.mulf %284, %320 : vector<4x4x4xf32>
    %322 = arith.addf %297, %300 : vector<4x4x4xf32>
    %323 = arith.addf %303, %306 : vector<4x4x4xf32>
    %324 = arith.addf %309, %312 : vector<4x4x4xf32>
    %325 = arith.addf %315, %318 : vector<4x4x4xf32>
    %326 = arith.addf %322, %323 : vector<4x4x4xf32>
    %327 = arith.addf %324, %325 : vector<4x4x4xf32>
    %328 = arith.addf %326, %327 : vector<4x4x4xf32>
    %329 = arith.addf %328, %321 : vector<4x4x4xf32>
    %cst_180 = arith.constant 0.000000e+00 : f32
    %330 = vector.shape_cast %291 : vector<4x4x1xi1> to vector<4x4x1xi1>
    %331 = vector.broadcast %330 : vector<4x4x1xi1> to vector<4x4x4xi1>
    %332 = vector.broadcast %cst_180 : f32 to vector<4x4x4xf32>
    %333 = arith.select %331, %329, %332 : vector<4x4x4xi1>, vector<4x4x4xf32>
    %c1_181 = arith.constant 1 : index
    %c5_182 = arith.constant 5 : index
    %c0_183 = arith.constant 0 : index
    %334 = vector.load %arg8[%c1_181, %c5_182, %c0_183] : memref<10x10x8xf32, #tpu.memory_space<vmem>>, vector<4x4x4xf32>
    tpu.vector_store %arg8[%c1_181, %c5_182, %c0_183], %333 {strides = array<i32>} : memref<10x10x8xf32, #tpu.memory_space<vmem>>, vector<4x4x4xf32>,
    %335 = vector.shape_cast %24 : vector<1x4xf32> to vector<1x1x4xf32>
    %336 = vector.broadcast %335 : vector<1x1x4xf32> to vector<4x4x4xf32>
    %337 = arith.mulf %268, %336 : vector<4x4x4xf32>
    %338 = vector.shape_cast %44 : vector<1x4xf32> to vector<1x1x4xf32>
    %339 = vector.broadcast %338 : vector<1x1x4xf32> to vector<4x4x4xf32>
    %340 = arith.addf %337, %339 : vector<4x4x4xf32>
    %341 = vector.shape_cast %26 : vector<1x4xf32> to vector<1x1x4xf32>
    %342 = vector.broadcast %341 : vector<1x1x4xf32> to vector<4x4x4xf32>
    %343 = arith.mulf %270, %342 : vector<4x4x4xf32>
    %344 = vector.shape_cast %28 : vector<1x4xf32> to vector<1x1x4xf32>
    %345 = vector.broadcast %344 : vector<1x1x4xf32> to vector<4x4x4xf32>
    %346 = arith.mulf %272, %345 : vector<4x4x4xf32>
    %347 = vector.shape_cast %30 : vector<1x4xf32> to vector<1x1x4xf32>
    %348 = vector.broadcast %347 : vector<1x1x4xf32> to vector<4x4x4xf32>
    %349 = arith.mulf %274, %348 : vector<4x4x4xf32>
    %350 = vector.shape_cast %32 : vector<1x4xf32> to vector<1x1x4xf32>
    %351 = vector.broadcast %350 : vector<1x1x4xf32> to vector<4x4x4xf32>
    %352 = arith.mulf %276, %351 : vector<4x4x4xf32>
    %353 = vector.shape_cast %34 : vector<1x4xf32> to vector<1x1x4xf32>
    %354 = vector.broadcast %353 : vector<1x1x4xf32> to vector<4x4x4xf32>
    %355 = arith.mulf %278, %354 : vector<4x4x4xf32>
    %356 = vector.shape_cast %36 : vector<1x4xf32> to vector<1x1x4xf32>
    %357 = vector.broadcast %356 : vector<1x1x4xf32> to vector<4x4x4xf32>
    %358 = arith.mulf %280, %357 : vector<4x4x4xf32>
    %359 = vector.shape_cast %38 : vector<1x4xf32> to vector<1x1x4xf32>
    %360 = vector.broadcast %359 : vector<1x1x4xf32> to vector<4x4x4xf32>
    %361 = arith.mulf %282, %360 : vector<4x4x4xf32>
    %362 = vector.shape_cast %40 : vector<1x4xf32> to vector<1x1x4xf32>
    %363 = vector.broadcast %362 : vector<1x1x4xf32> to vector<4x4x4xf32>
    %364 = arith.mulf %284, %363 : vector<4x4x4xf32>
    %365 = arith.addf %340, %343 : vector<4x4x4xf32>
    %366 = arith.addf %346, %349 : vector<4x4x4xf32>
    %367 = arith.addf %352, %355 : vector<4x4x4xf32>
    %368 = arith.addf %358, %361 : vector<4x4x4xf32>
    %369 = arith.addf %365, %366 : vector<4x4x4xf32>
    %370 = arith.addf %367, %368 : vector<4x4x4xf32>
    %371 = arith.addf %369, %370 : vector<4x4x4xf32>
    %372 = arith.addf %371, %364 : vector<4x4x4xf32>
    %cst_184 = arith.constant 0.000000e+00 : f32
    %373 = vector.shape_cast %291 : vector<4x4x1xi1> to vector<4x4x1xi1>
    %374 = vector.broadcast %373 : vector<4x4x1xi1> to vector<4x4x4xi1>
    %375 = vector.broadcast %cst_184 : f32 to vector<4x4x4xf32>
    %376 = arith.select %374, %372, %375 : vector<4x4x4xi1>, vector<4x4x4xf32>
    %c1_185 = arith.constant 1 : index
    %c5_186 = arith.constant 5 : index
    %c4_187 = arith.constant 4 : index
    %377 = vector.load %arg8[%c1_185, %c5_186, %c4_187] : memref<10x10x8xf32, #tpu.memory_space<vmem>>, vector<4x4x4xf32>
    tpu.vector_store %arg8[%c1_185, %c5_186, %c4_187], %376 {strides = array<i32>} : memref<10x10x8xf32, #tpu.memory_space<vmem>>, vector<4x4x4xf32>,
    %c0_188 = arith.constant 0 : index
    %c10_189 = arith.constant 10 : index
    %c10_190 = arith.constant 10 : index
    %c0_191 = arith.constant 0 : index
    %378 = vector.load %arg2[%c0_188, %c10_189, %c10_190, %c0_191] : memref<1x20x20x4xf32, #tpu.memory_space<vmem>>, vector<1x4x4x4xf32>
    %379 = vector.shape_cast %378 : vector<1x4x4x4xf32> to vector<4x4x4xf32>
    %c0_192 = arith.constant 0 : index
    %c10_193 = arith.constant 10 : index
    %c15_194 = arith.constant 15 : index
    %c0_195 = arith.constant 0 : index
    %380 = vector.load %arg2[%c0_192, %c10_193, %c15_194, %c0_195] : memref<1x20x20x4xf32, #tpu.memory_space<vmem>>, vector<1x4x4x4xf32>
    %381 = vector.shape_cast %380 : vector<1x4x4x4xf32> to vector<4x4x4xf32>
    %c0_196 = arith.constant 0 : index
    %c10_197 = arith.constant 10 : index
    %c1_198 = arith.constant 1 : index
    %c0_199 = arith.constant 0 : index
    %382 = vector.load %arg2[%c0_196, %c10_197, %c1_198, %c0_199] : memref<1x20x20x4xf32, #tpu.memory_space<vmem>>, vector<1x4x4x4xf32>
    %383 = vector.shape_cast %382 : vector<1x4x4x4xf32> to vector<4x4x4xf32>
    %c0_200 = arith.constant 0 : index
    %c15_201 = arith.constant 15 : index
    %c10_202 = arith.constant 10 : index
    %c0_203 = arith.constant 0 : index
    %384 = vector.load %arg2[%c0_200, %c15_201, %c10_202, %c0_203] : memref<1x20x20x4xf32, #tpu.memory_space<vmem>>, vector<1x4x4x4xf32>
    %385 = vector.shape_cast %384 : vector<1x4x4x4xf32> to vector<4x4x4xf32>
    %c0_204 = arith.constant 0 : index
    %c15_205 = arith.constant 15 : index
    %c15_206 = arith.constant 15 : index
    %c0_207 = arith.constant 0 : index
    %386 = vector.load %arg2[%c0_204, %c15_205, %c15_206, %c0_207] : memref<1x20x20x4xf32, #tpu.memory_space<vmem>>, vector<1x4x4x4xf32>
    %387 = vector.shape_cast %386 : vector<1x4x4x4xf32> to vector<4x4x4xf32>
    %c0_208 = arith.constant 0 : index
    %c15_209 = arith.constant 15 : index
    %c1_210 = arith.constant 1 : index
    %c0_211 = arith.constant 0 : index
    %388 = vector.load %arg2[%c0_208, %c15_209, %c1_210, %c0_211] : memref<1x20x20x4xf32, #tpu.memory_space<vmem>>, vector<1x4x4x4xf32>
    %389 = vector.shape_cast %388 : vector<1x4x4x4xf32> to vector<4x4x4xf32>
    %c0_212 = arith.constant 0 : index
    %c1_213 = arith.constant 1 : index
    %c10_214 = arith.constant 10 : index
    %c0_215 = arith.constant 0 : index
    %390 = vector.load %arg2[%c0_212, %c1_213, %c10_214, %c0_215] : memref<1x20x20x4xf32, #tpu.memory_space<vmem>>, vector<1x4x4x4xf32>
    %391 = vector.shape_cast %390 : vector<1x4x4x4xf32> to vector<4x4x4xf32>
    %c0_216 = arith.constant 0 : index
    %c1_217 = arith.constant 1 : index
    %c15_218 = arith.constant 15 : index
    %c0_219 = arith.constant 0 : index
    %392 = vector.load %arg2[%c0_216, %c1_217, %c15_218, %c0_219] : memref<1x20x20x4xf32, #tpu.memory_space<vmem>>, vector<1x4x4x4xf32>
    %393 = vector.shape_cast %392 : vector<1x4x4x4xf32> to vector<4x4x4xf32>
    %c0_220 = arith.constant 0 : index
    %c1_221 = arith.constant 1 : index
    %c1_222 = arith.constant 1 : index
    %c0_223 = arith.constant 0 : index
    %394 = vector.load %arg2[%c0_220, %c1_221, %c1_222, %c0_223] : memref<1x20x20x4xf32, #tpu.memory_space<vmem>>, vector<1x4x4x4xf32>
    %395 = vector.shape_cast %394 : vector<1x4x4x4xf32> to vector<4x4x4xf32>
    %396 = tpu.iota {dimensions = array<i32: 1>} : vector<4x4x1xi32>
    %c2_i32_224 = arith.constant 2 : i32
    %397 = vector.broadcast %c2_i32_224 : i32 to vector<4x4x1xi32>
    %398 = arith.muli %396, %397 : vector<4x4x1xi32>
    %c1_i32_225 = arith.constant 1 : i32
    %399 = vector.broadcast %c1_i32_225 : i32 to vector<4x4x1xi32>
    %400 = arith.addi %398, %399 : vector<4x4x1xi32>
    %401 = vector.broadcast %2 : i32 to vector<4x4x1xi32>
    %402 = arith.cmpi slt, %400, %401 : vector<4x4x1xi32>
    %403 = vector.shape_cast %6 : vector<1x4xf32> to vector<1x1x4xf32>
    %404 = vector.broadcast %403 : vector<1x1x4xf32> to vector<4x4x4xf32>
    %405 = arith.mulf %379, %404 : vector<4x4x4xf32>
    %406 = vector.shape_cast %42 : vector<1x4xf32> to vector<1x1x4xf32>
    %407 = vector.broadcast %406 : vector<1x1x4xf32> to vector<4x4x4xf32>
    %408 = arith.addf %405, %407 : vector<4x4x4xf32>
    %409 = vector.shape_cast %8 : vector<1x4xf32> to vector<1x1x4xf32>
    %410 = vector.broadcast %409 : vector<1x1x4xf32> to vector<4x4x4xf32>
    %411 = arith.mulf %381, %410 : vector<4x4x4xf32>
    %412 = vector.shape_cast %10 : vector<1x4xf32> to vector<1x1x4xf32>
    %413 = vector.broadcast %412 : vector<1x1x4xf32> to vector<4x4x4xf32>
    %414 = arith.mulf %383, %413 : vector<4x4x4xf32>
    %415 = vector.shape_cast %12 : vector<1x4xf32> to vector<1x1x4xf32>
    %416 = vector.broadcast %415 : vector<1x1x4xf32> to vector<4x4x4xf32>
    %417 = arith.mulf %385, %416 : vector<4x4x4xf32>
    %418 = vector.shape_cast %14 : vector<1x4xf32> to vector<1x1x4xf32>
    %419 = vector.broadcast %418 : vector<1x1x4xf32> to vector<4x4x4xf32>
    %420 = arith.mulf %387, %419 : vector<4x4x4xf32>
    %421 = vector.shape_cast %16 : vector<1x4xf32> to vector<1x1x4xf32>
    %422 = vector.broadcast %421 : vector<1x1x4xf32> to vector<4x4x4xf32>
    %423 = arith.mulf %389, %422 : vector<4x4x4xf32>
    %424 = vector.shape_cast %18 : vector<1x4xf32> to vector<1x1x4xf32>
    %425 = vector.broadcast %424 : vector<1x1x4xf32> to vector<4x4x4xf32>
    %426 = arith.mulf %391, %425 : vector<4x4x4xf32>
    %427 = vector.shape_cast %20 : vector<1x4xf32> to vector<1x1x4xf32>
    %428 = vector.broadcast %427 : vector<1x1x4xf32> to vector<4x4x4xf32>
    %429 = arith.mulf %393, %428 : vector<4x4x4xf32>
    %430 = vector.shape_cast %22 : vector<1x4xf32> to vector<1x1x4xf32>
    %431 = vector.broadcast %430 : vector<1x1x4xf32> to vector<4x4x4xf32>
    %432 = arith.mulf %395, %431 : vector<4x4x4xf32>
    %433 = arith.addf %408, %411 : vector<4x4x4xf32>
    %434 = arith.addf %414, %417 : vector<4x4x4xf32>
    %435 = arith.addf %420, %423 : vector<4x4x4xf32>
    %436 = arith.addf %426, %429 : vector<4x4x4xf32>
    %437 = arith.addf %433, %434 : vector<4x4x4xf32>
    %438 = arith.addf %435, %436 : vector<4x4x4xf32>
    %439 = arith.addf %437, %438 : vector<4x4x4xf32>
    %440 = arith.addf %439, %432 : vector<4x4x4xf32>
    %cst_226 = arith.constant 0.000000e+00 : f32
    %441 = vector.shape_cast %402 : vector<4x4x1xi1> to vector<4x4x1xi1>
    %442 = vector.broadcast %441 : vector<4x4x1xi1> to vector<4x4x4xi1>
    %443 = vector.broadcast %cst_226 : f32 to vector<4x4x4xf32>
    %444 = arith.select %442, %440, %443 : vector<4x4x4xi1>, vector<4x4x4xf32>
    %c1_227 = arith.constant 1 : index
    %c1_228 = arith.constant 1 : index
    %c0_229 = arith.constant 0 : index
    %445 = vector.load %arg8[%c1_227, %c1_228, %c0_229] : memref<10x10x8xf32, #tpu.memory_space<vmem>>, vector<4x4x4xf32>
    tpu.vector_store %arg8[%c1_227, %c1_228, %c0_229], %444 {strides = array<i32>} : memref<10x10x8xf32, #tpu.memory_space<vmem>>, vector<4x4x4xf32>,
    %446 = vector.shape_cast %24 : vector<1x4xf32> to vector<1x1x4xf32>
    %447 = vector.broadcast %446 : vector<1x1x4xf32> to vector<4x4x4xf32>
    %448 = arith.mulf %379, %447 : vector<4x4x4xf32>
    %449 = vector.shape_cast %44 : vector<1x4xf32> to vector<1x1x4xf32>
    %450 = vector.broadcast %449 : vector<1x1x4xf32> to vector<4x4x4xf32>
    %451 = arith.addf %448, %450 : vector<4x4x4xf32>
    %452 = vector.shape_cast %26 : vector<1x4xf32> to vector<1x1x4xf32>
    %453 = vector.broadcast %452 : vector<1x1x4xf32> to vector<4x4x4xf32>
    %454 = arith.mulf %381, %453 : vector<4x4x4xf32>
    %455 = vector.shape_cast %28 : vector<1x4xf32> to vector<1x1x4xf32>
    %456 = vector.broadcast %455 : vector<1x1x4xf32> to vector<4x4x4xf32>
    %457 = arith.mulf %383, %456 : vector<4x4x4xf32>
    %458 = vector.shape_cast %30 : vector<1x4xf32> to vector<1x1x4xf32>
    %459 = vector.broadcast %458 : vector<1x1x4xf32> to vector<4x4x4xf32>
    %460 = arith.mulf %385, %459 : vector<4x4x4xf32>
    %461 = vector.shape_cast %32 : vector<1x4xf32> to vector<1x1x4xf32>
    %462 = vector.broadcast %461 : vector<1x1x4xf32> to vector<4x4x4xf32>
    %463 = arith.mulf %387, %462 : vector<4x4x4xf32>
    %464 = vector.shape_cast %34 : vector<1x4xf32> to vector<1x1x4xf32>
    %465 = vector.broadcast %464 : vector<1x1x4xf32> to vector<4x4x4xf32>
    %466 = arith.mulf %389, %465 : vector<4x4x4xf32>
    %467 = vector.shape_cast %36 : vector<1x4xf32> to vector<1x1x4xf32>
    %468 = vector.broadcast %467 : vector<1x1x4xf32> to vector<4x4x4xf32>
    %469 = arith.mulf %391, %468 : vector<4x4x4xf32>
    %470 = vector.shape_cast %38 : vector<1x4xf32> to vector<1x1x4xf32>
    %471 = vector.broadcast %470 : vector<1x1x4xf32> to vector<4x4x4xf32>
    %472 = arith.mulf %393, %471 : vector<4x4x4xf32>
    %473 = vector.shape_cast %40 : vector<1x4xf32> to vector<1x1x4xf32>
    %474 = vector.broadcast %473 : vector<1x1x4xf32> to vector<4x4x4xf32>
    %475 = arith.mulf %395, %474 : vector<4x4x4xf32>
    %476 = arith.addf %451, %454 : vector<4x4x4xf32>
    %477 = arith.addf %457, %460 : vector<4x4x4xf32>
    %478 = arith.addf %463, %466 : vector<4x4x4xf32>
    %479 = arith.addf %469, %472 : vector<4x4x4xf32>
    %480 = arith.addf %476, %477 : vector<4x4x4xf32>
    %481 = arith.addf %478, %479 : vector<4x4x4xf32>
    %482 = arith.addf %480, %481 : vector<4x4x4xf32>
    %483 = arith.addf %482, %475 : vector<4x4x4xf32>
    %cst_230 = arith.constant 0.000000e+00 : f32
    %484 = vector.shape_cast %402 : vector<4x4x1xi1> to vector<4x4x1xi1>
    %485 = vector.broadcast %484 : vector<4x4x1xi1> to vector<4x4x4xi1>
    %486 = vector.broadcast %cst_230 : f32 to vector<4x4x4xf32>
    %487 = arith.select %485, %483, %486 : vector<4x4x4xi1>, vector<4x4x4xf32>
    %c1_231 = arith.constant 1 : index
    %c1_232 = arith.constant 1 : index
    %c4_233 = arith.constant 4 : index
    %488 = vector.load %arg8[%c1_231, %c1_232, %c4_233] : memref<10x10x8xf32, #tpu.memory_space<vmem>>, vector<4x4x4xf32>
    tpu.vector_store %arg8[%c1_231, %c1_232, %c4_233], %487 {strides = array<i32>} : memref<10x10x8xf32, #tpu.memory_space<vmem>>, vector<4x4x4xf32>,
    %c2_i32_234 = arith.constant 2 : i32
    %489 = arith.addi %c2_i32_234, %arg0 : i32
    %490 = arith.index_cast %489 : i32 to index
    %491 = memref.load %arg1[%490] : memref<4xi32, #tpu.memory_space<smem>>
    %c0_235 = arith.constant 0 : index
    %c0_236 = arith.constant 0 : index
    %c0_237 = arith.constant 0 : index
    %492 = vector.load %arg5[%c0_235, %c0_236, %c0_237] : memref<2x9x8xf32, #tpu.memory_space<vmem>>, vector<1x1x8xf32>
    %493 = vector.shape_cast %492 : vector<1x1x8xf32> to vector<1x8xf32>
    %c0_238 = arith.constant 0 : index
    %c1_239 = arith.constant 1 : index
    %c0_240 = arith.constant 0 : index
    %494 = vector.load %arg5[%c0_238, %c1_239, %c0_240] : memref<2x9x8xf32, #tpu.memory_space<vmem>>, vector<1x1x8xf32>
    %495 = vector.shape_cast %494 : vector<1x1x8xf32> to vector<1x8xf32>
    %c0_241 = arith.constant 0 : index
    %c2_242 = arith.constant 2 : index
    %c0_243 = arith.constant 0 : index
    %496 = vector.load %arg5[%c0_241, %c2_242, %c0_243] : memref<2x9x8xf32, #tpu.memory_space<vmem>>, vector<1x1x8xf32>
    %497 = vector.shape_cast %496 : vector<1x1x8xf32> to vector<1x8xf32>
    %c0_244 = arith.constant 0 : index
    %c3_245 = arith.constant 3 : index
    %c0_246 = arith.constant 0 : index
    %498 = vector.load %arg5[%c0_244, %c3_245, %c0_246] : memref<2x9x8xf32, #tpu.memory_space<vmem>>, vector<1x1x8xf32>
    %499 = vector.shape_cast %498 : vector<1x1x8xf32> to vector<1x8xf32>
    %c0_247 = arith.constant 0 : index
    %c4_248 = arith.constant 4 : index
    %c0_249 = arith.constant 0 : index
    %500 = vector.load %arg5[%c0_247, %c4_248, %c0_249] : memref<2x9x8xf32, #tpu.memory_space<vmem>>, vector<1x1x8xf32>
    %501 = vector.shape_cast %500 : vector<1x1x8xf32> to vector<1x8xf32>
    %c0_250 = arith.constant 0 : index
    %c5_251 = arith.constant 5 : index
    %c0_252 = arith.constant 0 : index
    %502 = vector.load %arg5[%c0_250, %c5_251, %c0_252] : memref<2x9x8xf32, #tpu.memory_space<vmem>>, vector<1x1x8xf32>
    %503 = vector.shape_cast %502 : vector<1x1x8xf32> to vector<1x8xf32>
    %c0_253 = arith.constant 0 : index
    %c6_254 = arith.constant 6 : index
    %c0_255 = arith.constant 0 : index
    %504 = vector.load %arg5[%c0_253, %c6_254, %c0_255] : memref<2x9x8xf32, #tpu.memory_space<vmem>>, vector<1x1x8xf32>
    %505 = vector.shape_cast %504 : vector<1x1x8xf32> to vector<1x8xf32>
    %c0_256 = arith.constant 0 : index
    %c7_257 = arith.constant 7 : index
    %c0_258 = arith.constant 0 : index
    %506 = vector.load %arg5[%c0_256, %c7_257, %c0_258] : memref<2x9x8xf32, #tpu.memory_space<vmem>>, vector<1x1x8xf32>
    %507 = vector.shape_cast %506 : vector<1x1x8xf32> to vector<1x8xf32>
    %c0_259 = arith.constant 0 : index
    %c8_260 = arith.constant 8 : index
    %c0_261 = arith.constant 0 : index
    %508 = vector.load %arg5[%c0_259, %c8_260, %c0_261] : memref<2x9x8xf32, #tpu.memory_space<vmem>>, vector<1x1x8xf32>
    %509 = vector.shape_cast %508 : vector<1x1x8xf32> to vector<1x8xf32>
    %c1_262 = arith.constant 1 : index
    %c0_263 = arith.constant 0 : index
    %c0_264 = arith.constant 0 : index
    %510 = vector.load %arg5[%c1_262, %c0_263, %c0_264] : memref<2x9x8xf32, #tpu.memory_space<vmem>>, vector<1x1x8xf32>
    %511 = vector.shape_cast %510 : vector<1x1x8xf32> to vector<1x8xf32>
    %c1_265 = arith.constant 1 : index
    %c1_266 = arith.constant 1 : index
    %c0_267 = arith.constant 0 : index
    %512 = vector.load %arg5[%c1_265, %c1_266, %c0_267] : memref<2x9x8xf32, #tpu.memory_space<vmem>>, vector<1x1x8xf32>
    %513 = vector.shape_cast %512 : vector<1x1x8xf32> to vector<1x8xf32>
    %c1_268 = arith.constant 1 : index
    %c2_269 = arith.constant 2 : index
    %c0_270 = arith.constant 0 : index
    %514 = vector.load %arg5[%c1_268, %c2_269, %c0_270] : memref<2x9x8xf32, #tpu.memory_space<vmem>>, vector<1x1x8xf32>
    %515 = vector.shape_cast %514 : vector<1x1x8xf32> to vector<1x8xf32>
    %c1_271 = arith.constant 1 : index
    %c3_272 = arith.constant 3 : index
    %c0_273 = arith.constant 0 : index
    %516 = vector.load %arg5[%c1_271, %c3_272, %c0_273] : memref<2x9x8xf32, #tpu.memory_space<vmem>>, vector<1x1x8xf32>
    %517 = vector.shape_cast %516 : vector<1x1x8xf32> to vector<1x8xf32>
    %c1_274 = arith.constant 1 : index
    %c4_275 = arith.constant 4 : index
    %c0_276 = arith.constant 0 : index
    %518 = vector.load %arg5[%c1_274, %c4_275, %c0_276] : memref<2x9x8xf32, #tpu.memory_space<vmem>>, vector<1x1x8xf32>
    %519 = vector.shape_cast %518 : vector<1x1x8xf32> to vector<1x8xf32>
    %c1_277 = arith.constant 1 : index
    %c5_278 = arith.constant 5 : index
    %c0_279 = arith.constant 0 : index
    %520 = vector.load %arg5[%c1_277, %c5_278, %c0_279] : memref<2x9x8xf32, #tpu.memory_space<vmem>>, vector<1x1x8xf32>
    %521 = vector.shape_cast %520 : vector<1x1x8xf32> to vector<1x8xf32>
    %c1_280 = arith.constant 1 : index
    %c6_281 = arith.constant 6 : index
    %c0_282 = arith.constant 0 : index
    %522 = vector.load %arg5[%c1_280, %c6_281, %c0_282] : memref<2x9x8xf32, #tpu.memory_space<vmem>>, vector<1x1x8xf32>
    %523 = vector.shape_cast %522 : vector<1x1x8xf32> to vector<1x8xf32>
    %c1_283 = arith.constant 1 : index
    %c7_284 = arith.constant 7 : index
    %c0_285 = arith.constant 0 : index
    %524 = vector.load %arg5[%c1_283, %c7_284, %c0_285] : memref<2x9x8xf32, #tpu.memory_space<vmem>>, vector<1x1x8xf32>
    %525 = vector.shape_cast %524 : vector<1x1x8xf32> to vector<1x8xf32>
    %c1_286 = arith.constant 1 : index
    %c8_287 = arith.constant 8 : index
    %c0_288 = arith.constant 0 : index
    %526 = vector.load %arg5[%c1_286, %c8_287, %c0_288] : memref<2x9x8xf32, #tpu.memory_space<vmem>>, vector<1x1x8xf32>
    %527 = vector.shape_cast %526 : vector<1x1x8xf32> to vector<1x8xf32>
    %c0_289 = arith.constant 0 : index
    %c0_290 = arith.constant 0 : index
    %c0_291 = arith.constant 0 : index
    %528 = vector.load %arg6[%c0_289, %c0_290, %c0_291] : memref<2x1x8xf32, #tpu.memory_space<vmem>>, vector<1x1x8xf32>
    %529 = vector.shape_cast %528 : vector<1x1x8xf32> to vector<1x8xf32>
    %c1_292 = arith.constant 1 : index
    %c0_293 = arith.constant 0 : index
    %c0_294 = arith.constant 0 : index
    %530 = vector.load %arg6[%c1_292, %c0_293, %c0_294] : memref<2x1x8xf32, #tpu.memory_space<vmem>>, vector<1x1x8xf32>
    %531 = vector.shape_cast %530 : vector<1x1x8xf32> to vector<1x8xf32>
    %c0_295 = arith.constant 0 : index
    %c0_296 = arith.constant 0 : index
    %c0_297 = arith.constant 0 : index
    %532 = vector.load %arg8[%c0_295, %c0_296, %c0_297] : memref<10x10x8xf32, #tpu.memory_space<vmem>>, vector<4x4x8xf32>
    %c0_298 = arith.constant 0 : index
    %c5_299 = arith.constant 5 : index
    %c0_300 = arith.constant 0 : index
    %533 = vector.load %arg8[%c0_298, %c5_299, %c0_300] : memref<10x10x8xf32, #tpu.memory_space<vmem>>, vector<4x4x8xf32>
    %c0_301 = arith.constant 0 : index
    %c1_302 = arith.constant 1 : index
    %c0_303 = arith.constant 0 : index
    %534 = vector.load %arg8[%c0_301, %c1_302, %c0_303] : memref<10x10x8xf32, #tpu.memory_space<vmem>>, vector<4x4x8xf32>
    %c5_304 = arith.constant 5 : index
    %c0_305 = arith.constant 0 : index
    %c0_306 = arith.constant 0 : index
    %535 = vector.load %arg8[%c5_304, %c0_305, %c0_306] : memref<10x10x8xf32, #tpu.memory_space<vmem>>, vector<4x4x8xf32>
    %c5_307 = arith.constant 5 : index
    %c5_308 = arith.constant 5 : index
    %c0_309 = arith.constant 0 : index
    %536 = vector.load %arg8[%c5_307, %c5_308, %c0_309] : memref<10x10x8xf32, #tpu.memory_space<vmem>>, vector<4x4x8xf32>
    %c5_310 = arith.constant 5 : index
    %c1_311 = arith.constant 1 : index
    %c0_312 = arith.constant 0 : index
    %537 = vector.load %arg8[%c5_310, %c1_311, %c0_312] : memref<10x10x8xf32, #tpu.memory_space<vmem>>, vector<4x4x8xf32>
    %c1_313 = arith.constant 1 : index
    %c0_314 = arith.constant 0 : index
    %c0_315 = arith.constant 0 : index
    %538 = vector.load %arg8[%c1_313, %c0_314, %c0_315] : memref<10x10x8xf32, #tpu.memory_space<vmem>>, vector<4x4x8xf32>
    %c1_316 = arith.constant 1 : index
    %c5_317 = arith.constant 5 : index
    %c0_318 = arith.constant 0 : index
    %539 = vector.load %arg8[%c1_316, %c5_317, %c0_318] : memref<10x10x8xf32, #tpu.memory_space<vmem>>, vector<4x4x8xf32>
    %c1_319 = arith.constant 1 : index
    %c1_320 = arith.constant 1 : index
    %c0_321 = arith.constant 0 : index
    %540 = vector.load %arg8[%c1_319, %c1_320, %c0_321] : memref<10x10x8xf32, #tpu.memory_space<vmem>>, vector<4x4x8xf32>
    %541 = tpu.iota {dimensions = array<i32: 1>} : vector<4x4x1xi32>
    %c1_i32_322 = arith.constant 1 : i32
    %542 = vector.broadcast %c1_i32_322 : i32 to vector<4x4x1xi32>
    %543 = arith.muli %541, %542 : vector<4x4x1xi32>
    %c0_i32_323 = arith.constant 0 : i32
    %544 = vector.broadcast %c0_i32_323 : i32 to vector<4x4x1xi32>
    %545 = arith.addi %543, %544 : vector<4x4x1xi32>
    %546 = vector.broadcast %491 : i32 to vector<4x4x1xi32>
    %547 = arith.cmpi slt, %545, %546 : vector<4x4x1xi32>
    %548 = vector.shape_cast %493 : vector<1x8xf32> to vector<1x1x8xf32>
    %549 = vector.broadcast %548 : vector<1x1x8xf32> to vector<4x4x8xf32>
    %550 = arith.mulf %532, %549 : vector<4x4x8xf32>
    %551 = vector.shape_cast %529 : vector<1x8xf32> to vector<1x1x8xf32>
    %552 = vector.broadcast %551 : vector<1x1x8xf32> to vector<4x4x8xf32>
    %553 = arith.addf %550, %552 : vector<4x4x8xf32>
    %554 = vector.shape_cast %495 : vector<1x8xf32> to vector<1x1x8xf32>
    %555 = vector.broadcast %554 : vector<1x1x8xf32> to vector<4x4x8xf32>
    %556 = arith.mulf %533, %555 : vector<4x4x8xf32>
    %557 = vector.shape_cast %497 : vector<1x8xf32> to vector<1x1x8xf32>
    %558 = vector.broadcast %557 : vector<1x1x8xf32> to vector<4x4x8xf32>
    %559 = arith.mulf %534, %558 : vector<4x4x8xf32>
    %560 = vector.shape_cast %499 : vector<1x8xf32> to vector<1x1x8xf32>
    %561 = vector.broadcast %560 : vector<1x1x8xf32> to vector<4x4x8xf32>
    %562 = arith.mulf %535, %561 : vector<4x4x8xf32>
    %563 = vector.shape_cast %501 : vector<1x8xf32> to vector<1x1x8xf32>
    %564 = vector.broadcast %563 : vector<1x1x8xf32> to vector<4x4x8xf32>
    %565 = arith.mulf %536, %564 : vector<4x4x8xf32>
    %566 = vector.shape_cast %503 : vector<1x8xf32> to vector<1x1x8xf32>
    %567 = vector.broadcast %566 : vector<1x1x8xf32> to vector<4x4x8xf32>
    %568 = arith.mulf %537, %567 : vector<4x4x8xf32>
    %569 = vector.shape_cast %505 : vector<1x8xf32> to vector<1x1x8xf32>
    %570 = vector.broadcast %569 : vector<1x1x8xf32> to vector<4x4x8xf32>
    %571 = arith.mulf %538, %570 : vector<4x4x8xf32>
    %572 = vector.shape_cast %507 : vector<1x8xf32> to vector<1x1x8xf32>
    %573 = vector.broadcast %572 : vector<1x1x8xf32> to vector<4x4x8xf32>
    %574 = arith.mulf %539, %573 : vector<4x4x8xf32>
    %575 = vector.shape_cast %509 : vector<1x8xf32> to vector<1x1x8xf32>
    %576 = vector.broadcast %575 : vector<1x1x8xf32> to vector<4x4x8xf32>
    %577 = arith.mulf %540, %576 : vector<4x4x8xf32>
    %578 = arith.addf %553, %556 : vector<4x4x8xf32>
    %579 = arith.addf %559, %562 : vector<4x4x8xf32>
    %580 = arith.addf %565, %568 : vector<4x4x8xf32>
    %581 = arith.addf %571, %574 : vector<4x4x8xf32>
    %582 = arith.addf %578, %579 : vector<4x4x8xf32>
    %583 = arith.addf %580, %581 : vector<4x4x8xf32>
    %584 = arith.addf %582, %583 : vector<4x4x8xf32>
    %585 = arith.addf %584, %577 : vector<4x4x8xf32>
    %cst_324 = arith.constant 0.000000e+00 : f32
    %586 = vector.shape_cast %547 : vector<4x4x1xi1> to vector<4x4x1xi1>
    %587 = vector.broadcast %586 : vector<4x4x1xi1> to vector<4x4x8xi1>
    %588 = vector.broadcast %cst_324 : f32 to vector<4x4x8xf32>
    %589 = arith.select %587, %585, %588 : vector<4x4x8xi1>, vector<4x4x8xf32>
    %c0_325 = arith.constant 0 : index
    %c0_326 = arith.constant 0 : index
    %c0_327 = arith.constant 0 : index
    %c0_328 = arith.constant 0 : index
    %590 = vector.load %arg7[%c0_325, %c0_326, %c0_327, %c0_328] : memref<1x4x4x16xf32, #tpu.memory_space<vmem>>, vector<1x4x4x8xf32>
    %591 = vector.shape_cast %590 : vector<1x4x4x8xf32> to vector<4x4x8xf32>
    %592 = vector.shape_cast %589 : vector<4x4x8xf32> to vector<1x4x4x8xf32>
    tpu.vector_store %arg7[%c0_325, %c0_326, %c0_327, %c0_328], %592 {strides = array<i32>} : memref<1x4x4x16xf32, #tpu.memory_space<vmem>>, vector<1x4x4x8xf32>,
    %593 = vector.shape_cast %511 : vector<1x8xf32> to vector<1x1x8xf32>
    %594 = vector.broadcast %593 : vector<1x1x8xf32> to vector<4x4x8xf32>
    %595 = arith.mulf %532, %594 : vector<4x4x8xf32>
    %596 = vector.shape_cast %531 : vector<1x8xf32> to vector<1x1x8xf32>
    %597 = vector.broadcast %596 : vector<1x1x8xf32> to vector<4x4x8xf32>
    %598 = arith.addf %595, %597 : vector<4x4x8xf32>
    %599 = vector.shape_cast %513 : vector<1x8xf32> to vector<1x1x8xf32>
    %600 = vector.broadcast %599 : vector<1x1x8xf32> to vector<4x4x8xf32>
    %601 = arith.mulf %533, %600 : vector<4x4x8xf32>
    %602 = vector.shape_cast %515 : vector<1x8xf32> to vector<1x1x8xf32>
    %603 = vector.broadcast %602 : vector<1x1x8xf32> to vector<4x4x8xf32>
    %604 = arith.mulf %534, %603 : vector<4x4x8xf32>
    %605 = vector.shape_cast %517 : vector<1x8xf32> to vector<1x1x8xf32>
    %606 = vector.broadcast %605 : vector<1x1x8xf32> to vector<4x4x8xf32>
    %607 = arith.mulf %535, %606 : vector<4x4x8xf32>
    %608 = vector.shape_cast %519 : vector<1x8xf32> to vector<1x1x8xf32>
    %609 = vector.broadcast %608 : vector<1x1x8xf32> to vector<4x4x8xf32>
    %610 = arith.mulf %536, %609 : vector<4x4x8xf32>
    %611 = vector.shape_cast %521 : vector<1x8xf32> to vector<1x1x8xf32>
    %612 = vector.broadcast %611 : vector<1x1x8xf32> to vector<4x4x8xf32>
    %613 = arith.mulf %537, %612 : vector<4x4x8xf32>
    %614 = vector.shape_cast %523 : vector<1x8xf32> to vector<1x1x8xf32>
    %615 = vector.broadcast %614 : vector<1x1x8xf32> to vector<4x4x8xf32>
    %616 = arith.mulf %538, %615 : vector<4x4x8xf32>
    %617 = vector.shape_cast %525 : vector<1x8xf32> to vector<1x1x8xf32>
    %618 = vector.broadcast %617 : vector<1x1x8xf32> to vector<4x4x8xf32>
    %619 = arith.mulf %539, %618 : vector<4x4x8xf32>
    %620 = vector.shape_cast %527 : vector<1x8xf32> to vector<1x1x8xf32>
    %621 = vector.broadcast %620 : vector<1x1x8xf32> to vector<4x4x8xf32>
    %622 = arith.mulf %540, %621 : vector<4x4x8xf32>
    %623 = arith.addf %598, %601 : vector<4x4x8xf32>
    %624 = arith.addf %604, %607 : vector<4x4x8xf32>
    %625 = arith.addf %610, %613 : vector<4x4x8xf32>
    %626 = arith.addf %616, %619 : vector<4x4x8xf32>
    %627 = arith.addf %623, %624 : vector<4x4x8xf32>
    %628 = arith.addf %625, %626 : vector<4x4x8xf32>
    %629 = arith.addf %627, %628 : vector<4x4x8xf32>
    %630 = arith.addf %629, %622 : vector<4x4x8xf32>
    %cst_329 = arith.constant 0.000000e+00 : f32
    %631 = vector.shape_cast %547 : vector<4x4x1xi1> to vector<4x4x1xi1>
    %632 = vector.broadcast %631 : vector<4x4x1xi1> to vector<4x4x8xi1>
    %633 = vector.broadcast %cst_329 : f32 to vector<4x4x8xf32>
    %634 = arith.select %632, %630, %633 : vector<4x4x8xi1>, vector<4x4x8xf32>
    %c0_330 = arith.constant 0 : index
    %c0_331 = arith.constant 0 : index
    %c0_332 = arith.constant 0 : index
    %c8_333 = arith.constant 8 : index
    %635 = vector.load %arg7[%c0_330, %c0_331, %c0_332, %c8_333] : memref<1x4x4x16xf32, #tpu.memory_space<vmem>>, vector<1x4x4x8xf32>
    %636 = vector.shape_cast %635 : vector<1x4x4x8xf32> to vector<4x4x8xf32>
    %637 = vector.shape_cast %634 : vector<4x4x8xf32> to vector<1x4x4x8xf32>
    tpu.vector_store %arg7[%c0_330, %c0_331, %c0_332, %c8_333], %637 {strides = array<i32>} : memref<1x4x4x16xf32, #tpu.memory_space<vmem>>, vector<1x4x4x8xf32>,
    return
  }
  func.func @transform_0(%arg0: i32, %arg1: memref<4xi32, #tpu.memory_space<smem>>) -> (i32, i32, i32, i32) {
    %c0_i32 = arith.constant 0 : i32
    %c0_i32_0 = arith.constant 0 : i32
    %c0_i32_1 = arith.constant 0 : i32
    %c0_i32_2 = arith.constant 0 : i32
    return %arg0, %c0_i32, %c0_i32_0, %c0_i32_1 : i32, i32, i32, i32
  }
  func.func @transform_1(%arg0: i32, %arg1: memref<4xi32, #tpu.memory_space<smem>>) -> (i32, i32, i32) {
    %c0_i32 = arith.constant 0 : i32
    %c0_i32_0 = arith.constant 0 : i32
    %c0_i32_1 = arith.constant 0 : i32
    %c0_i32_2 = arith.constant 0 : i32
    return %c0_i32, %c0_i32_0, %c0_i32_1 : i32, i32, i32
  }
  func.func @transform_2(%arg0: i32, %arg1: memref<4xi32, #tpu.memory_space<smem>>) -> (i32, i32, i32) {
    %c0_i32 = arith.constant 0 : i32
    %c0_i32_0 = arith.constant 0 : i32
    %c0_i32_1 = arith.constant 0 : i32
    %c0_i32_2 = arith.constant 0 : i32
    return %c0_i32, %c0_i32_0, %c0_i32_1 : i32, i32, i32
  }
  func.func @transform_3(%arg0: i32, %arg1: memref<4xi32, #tpu.memory_space<smem>>) -> (i32, i32, i32) {
    %c0_i32 = arith.constant 0 : i32
    %c0_i32_0 = arith.constant 0 : i32
    %c0_i32_1 = arith.constant 0 : i32
    %c0_i32_2 = arith.constant 0 : i32
    return %c0_i32, %c0_i32_0, %c0_i32_1 : i32, i32, i32
  }
  func.func @transform_4(%arg0: i32, %arg1: memref<4xi32, #tpu.memory_space<smem>>) -> (i32, i32, i32) {
    %c0_i32 = arith.constant 0 : i32
    %c0_i32_0 = arith.constant 0 : i32
    %c0_i32_1 = arith.constant 0 : i32
    %c0_i32_2 = arith.constant 0 : i32
    return %c0_i32, %c0_i32_0, %c0_i32_1 : i32, i32, i32
  }
  func.func @transform_5(%arg0: i32, %arg1: memref<4xi32, #tpu.memory_space<smem>>) -> (i32, i32, i32, i32) {
    %c0_i32 = arith.constant 0 : i32
    %c0_i32_0 = arith.constant 0 : i32
    %c0_i32_1 = arith.constant 0 : i32
    %c0_i32_2 = arith.constant 0 : i32
    return %arg0, %c0_i32, %c0_i32_0, %c0_i32_1 : i32, i32, i32, i32
  }
}

</mosaic_0001>

<llo_original>
// kernel: _lambda_.1
$region0: #{_lambda_.1}
  #allocation0 [shape = 'u32[]', space=smem, size = 0x4, offset = 0x4, fixed_abs, tag = 'smem constant byte address 0x4 - core index']
  #allocation1 [shape = 'u32[144,128]{1,0:T(1,128)}', space=vmem, size = 0x12000, scoped, tag = 'internal scratch']
  #allocation2 [shape = 'f32[10,10,8]{2,1,0:T(8,128)}', space=vmem, size = 0x14000, scoped, tag = 'scratch operand']
  #allocation3 [shape = 's32[1]{0}', space=sflag, size = 0x4, scoped, tag = 'scoped memory for _lambda_.1']
  #allocation4 [shape = 'u8[512]{0}', space=smem, size = 0x200, scoped, tag = 'prefetched SMEM operand 0']
  %s0 = inlined_call_operand.vmem [shape: s32[4], index: 0, kind: input, shape index: {}]
  %s1 = inlined_call_operand.vmem [shape: f32[2,20,20,4], index: 1, kind: input, shape index: {}]
  %s2 = inlined_call_operand.vmem [shape: f32[2,9,4], index: 2, kind: input, shape index: {}]
  %s3 = inlined_call_operand.vmem [shape: f32[2,1,4], index: 3, kind: input, shape index: {}]
  %s4 = inlined_call_operand.vmem [shape: f32[2,9,8], index: 4, kind: input, shape index: {}]
  %s5 = inlined_call_operand.vmem [shape: f32[2,1,8], index: 5, kind: input, shape index: {}]
  %s6 = inlined_call_operand.vmem [shape: f32[2,4,4,16], index: 6, kind: output, shape index: {}]
  %s7 = sld [smem:[#allocation0]]
  $region53: #{_lambda_.1} parent=0
    _
  %s9 = ssub.s32 1, %s7
  %s10 = scalar_select 0, %s9, %s7
  %s11 = sshll.u32 %s0, 4
  %s12 = int_to_ptr.vmem [resolvable:$true] %s11
  %14 = dma.vmem_to_smem %s12, 16, [#allocation4], [#allocation3]
  %15 = dma.done [#allocation3], 16
  %16 = sfence
  loop: start=0, step=1, limit=4
  $region2: #{_lambda_.1} parent=0 // loop_pre_header
    _
  $region3: #{_lambda_.1} parent=0 // loop_header
    %s18 = sphi 0, %s22
    %p19 = scmp.ge.s32.totalorder %s18, 4
    %s28 = sphi 0, %s30
    %s31 = sphi 0, %s28
    %s32 = sphi 0, %s31
    %s48 = sphi 0, %s32
    %s52 = sphi 0, %s52
    %s54 = sphi 0, %s52
    %s55 = sphi 0, %s54
    %s69 = sphi 0, %s55
    %s73 = sphi 0, %s73
    %s75 = sphi 0, %s73
    %s76 = sphi 0, %s75
    %s90 = sphi 0, %s76
    %s94 = sphi 0, %s94
    %s96 = sphi 0, %s94
    %s97 = sphi 0, %s96
    %s111 = sphi 0, %s97
    %s115 = sphi 0, %s115
    %s117 = sphi 0, %s115
    %s118 = sphi 0, %s117
    %s132 = sphi 0, %s118
    %s138 = sphi 0, %s140
    %s141 = sphi 0, %s138
    %s142 = sphi 0, %s141
    %s158 = sphi 0, %s142
  $region4: #{_lambda_.1} parent=0 // loop_header_branch
    %21 = sbr.rel (%p19) target = $region8
  $region5: #{_lambda_.1} parent=0 // loop_body
    %s23 = ssub.s32 %s18, 1
    %s24 = ssub.s32 %s18, 2
    %s25 = sadd.s32 %s18, 1
    %s26 = ssub.s32 %s18, %s25
    %p27 = scmp.eq.s32.totalorder %s26, 0
    %s29 = sadd.s32 %s28, 1
    %s30 = scalar_select %p27, %s28, %s29
    %p33 = pneg %p27
    %p34 = scmp.eq.s32.totalorder %s18, 1
    %p35 = por %p33, %p34
    %p36 = scmp.ne.s32.totalorder %s28, %s31
    %p37 = scmp.eq.s32.totalorder %s18, 0
    %p38 = por %p36, %p37
    %p39 = scmp.ne.s32.totalorder %s28, %s31
    %p40 = scmp.eq.s32.totalorder %s23, 1
    %p41 = por %p39, %p40
    %p42 = scmp.ne.s32.totalorder %s31, %s32
    %p43 = scmp.eq.s32.totalorder %s23, 0
    %p44 = por %p42, %p43
    %p45 = scmp.ne.s32.totalorder %s31, %s32
    %p46 = scmp.eq.s32.totalorder %s24, 1
    %p47 = por %p45, %p46
    %p49 = scmp.ne.s32.totalorder %s32, %s48
    %p50 = scmp.eq.s32.totalorder %s24, 0
    %p51 = por %p49, %p50
    %s53 = sadd.s32 %s52, 1
    %p56 = scmp.eq.s32.totalorder %s18, 1
    %p57 = scmp.ne.s32.totalorder %s52, %s54
    %p58 = scmp.eq.s32.totalorder %s18, 0
    %p59 = por %p57, %p58
    %p60 = scmp.ne.s32.totalorder %s52, %s54
    %p61 = scmp.eq.s32.totalorder %s23, 1
    %p62 = por %p60, %p61
    %p63 = scmp.ne.s32.totalorder %s54, %s55
    %p64 = scmp.eq.s32.totalorder %s23, 0
    %p65 = por %p63, %p64
    %p66 = scmp.ne.s32.totalorder %s54, %s55
    %p67 = scmp.eq.s32.totalorder %s24, 1
    %p68 = por %p66, %p67
    %p70 = scmp.ne.s32.totalorder %s55, %s69
    %p71 = scmp.eq.s32.totalorder %s24, 0
    %p72 = por %p70, %p71
    %s74 = sadd.s32 %s73, 1
    %p77 = scmp.eq.s32.totalorder %s18, 1
    %p78 = scmp.ne.s32.totalorder %s73, %s75
    %p79 = scmp.eq.s32.totalorder %s18, 0
    %p80 = por %p78, %p79
    %p81 = scmp.ne.s32.totalorder %s73, %s75
    %p82 = scmp.eq.s32.totalorder %s23, 1
    %p83 = por %p81, %p82
    %p84 = scmp.ne.s32.totalorder %s75, %s76
    %p85 = scmp.eq.s32.totalorder %s23, 0
    %p86 = por %p84, %p85
    %p87 = scmp.ne.s32.totalorder %s75, %s76
    %p88 = scmp.eq.s32.totalorder %s24, 1
    %p89 = por %p87, %p88
    %p91 = scmp.ne.s32.totalorder %s76, %s90
    %p92 = scmp.eq.s32.totalorder %s24, 0
    %p93 = por %p91, %p92
    %s95 = sadd.s32 %s94, 1
    %p98 = scmp.eq.s32.totalorder %s18, 1
    %p99 = scmp.ne.s32.totalorder %s94, %s96
    %p100 = scmp.eq.s32.totalorder %s18, 0
    %p101 = por %p99, %p100
    %p102 = scmp.ne.s32.totalorder %s94, %s96
    %p103 = scmp.eq.s32.totalorder %s23, 1
    %p104 = por %p102, %p103
    %p105 = scmp.ne.s32.totalorder %s96, %s97
    %p106 = scmp.eq.s32.totalorder %s23, 0
    %p107 = por %p105, %p106
    %p108 = scmp.ne.s32.totalorder %s96, %s97
    %p109 = scmp.eq.s32.totalorder %s24, 1
    %p110 = por %p108, %p109
    %p112 = scmp.ne.s32.totalorder %s97, %s111
    %p113 = scmp.eq.s32.totalorder %s24, 0
    %p114 = por %p112, %p113
    %s116 = sadd.s32 %s115, 1
    %p119 = scmp.eq.s32.totalorder %s18, 1
    %p120 = scmp.ne.s32.totalorder %s115, %s117
    %p121 = scmp.eq.s32.totalorder %s18, 0
    %p122 = por %p120, %p121
    %p123 = scmp.ne.s32.totalorder %s115, %s117
    %p124 = scmp.eq.s32.totalorder %s23, 1
    %p125 = por %p123, %p124
    %p126 = scmp.ne.s32.totalorder %s117, %s118
    %p127 = scmp.eq.s32.totalorder %s23, 0
    %p128 = por %p126, %p127
    %p129 = scmp.ne.s32.totalorder %s117, %s118
    %p130 = scmp.eq.s32.totalorder %s24, 1
    %p131 = por %p129, %p130
    %p133 = scmp.ne.s32.totalorder %s118, %s132
    %p134 = scmp.eq.s32.totalorder %s24, 0
    %p135 = por %p133, %p134
    %s136 = ssub.s32 %s18, %s25
    %p137 = scmp.eq.s32.totalorder %s136, 0
    %s139 = sadd.s32 %s138, 1
    %s140 = scalar_select %p137, %s138, %s139
    %p143 = pneg %p137
    %p144 = scmp.eq.s32.totalorder %s18, 1
    %p145 = por %p143, %p144
    %p146 = scmp.ne.s32.totalorder %s138, %s141
    %p147 = scmp.eq.s32.totalorder %s18, 0
    %p148 = por %p146, %p147
    %p149 = scmp.ne.s32.totalorder %s138, %s141
    %p150 = scmp.eq.s32.totalorder %s23, 1
    %p151 = por %p149, %p150
    %p152 = scmp.ne.s32.totalorder %s141, %s142
    %p153 = scmp.eq.s32.totalorder %s23, 0
    %p154 = por %p152, %p153
    %p155 = scmp.ne.s32.totalorder %s141, %s142
    %p156 = scmp.eq.s32.totalorder %s24, 1
    %p157 = por %p155, %p156
    %p159 = scmp.ne.s32.totalorder %s142, %s158
    %p160 = scmp.eq.s32.totalorder %s24, 0
    %p161 = por %p159, %p160
    %p162 = scmp.le.s32.totalorder 1, %s18
    %p163 = scmp.lt.s32.totalorder %s18, 3
    %p164 = pnand %p162, %p163
    %p165 = pneg %p164
    // Predicated region
    $region9: #{_lambda_.1} parent=5 // pred_check
      _
    $region10: #{_lambda_.1} parent=5 // pred_check_branch
      %167 = sbr.rel (%p164) target = $region12
    $region11: #{_lambda_.1} parent=5 // pred_region
      %s168 = ssub.s32 %s18, 1
      // Predicated region
      $region13: #{_lambda_.1} parent=11 // pred_check
        %p169 = pneg %p65
      $region14: #{_lambda_.1} parent=11 // pred_check_branch
        %171 = sbr.rel (%p169) target = $region16
      $region15: #{_lambda_.1} parent=11 // pred_region
        _
      $region16: #{_lambda_.1} parent=11 // pred_fallthru
        _
      // Predicated region
      $region17: #{_lambda_.1} parent=11 // pred_check
        %p172 = pneg %p86
      $region18: #{_lambda_.1} parent=11 // pred_check_branch
        %174 = sbr.rel (%p172) target = $region20
      $region19: #{_lambda_.1} parent=11 // pred_region
        _
      $region20: #{_lambda_.1} parent=11 // pred_fallthru
        _
      // Predicated region
      $region21: #{_lambda_.1} parent=11 // pred_check
        %p175 = pneg %p107
      $region22: #{_lambda_.1} parent=11 // pred_check_branch
        %177 = sbr.rel (%p175) target = $region24
      $region23: #{_lambda_.1} parent=11 // pred_region
        _
      $region24: #{_lambda_.1} parent=11 // pred_fallthru
        _
      // Predicated region
      $region25: #{_lambda_.1} parent=11 // pred_check
        %p178 = pneg %p128
      $region26: #{_lambda_.1} parent=11 // pred_check_branch
        %180 = sbr.rel (%p178) target = $region28
      $region27: #{_lambda_.1} parent=11 // pred_region
        _
      $region28: #{_lambda_.1} parent=11 // pred_fallthru
        _
    $region12: #{_lambda_.1} parent=5 // pred_fallthru
      _
    %p181 = scmp.lt.s32.totalorder %s18, 2
    // Predicated region
    $region29: #{_lambda_.1} parent=5 // pred_check
      %p182 = pneg %p181
    $region30: #{_lambda_.1} parent=5 // pred_check_branch
      %184 = sbr.rel (%p182) target = $region32
    $region31: #{_lambda_.1} parent=5 // pred_region
      // Predicated region
      $region33: #{_lambda_.1} parent=31 // pred_check
        %p185 = pneg %p38
      $region34: #{_lambda_.1} parent=31 // pred_check_branch
        %187 = sbr.rel (%p185) target = $region36
      $region35: #{_lambda_.1} parent=31 // pred_region
        %p188 = scmp.lt.s32.totalorder %s18, 1
        %s189 = scalar_select %p188, %s18, 1
        %s190 = smul.addr %s189, 60
        %s191 = smul.addr %s190, 8
        %s192 = scalar_lea.vmem %s1, %s191
      $region36: #{_lambda_.1} parent=31 // pred_fallthru
        _
    $region32: #{_lambda_.1} parent=5 // pred_fallthru
      _
    %p193 = scmp.le.s32.totalorder 1, %s18
    %p194 = scmp.lt.s32.totalorder %s18, 3
    %p195 = pnand %p193, %p194
    %p196 = pneg %p195
    // Predicated region
    $region37: #{_lambda_.1} parent=5 // pred_check
      _
    $region38: #{_lambda_.1} parent=5 // pred_check_branch
      %198 = sbr.rel (%p195) target = $region40
    $region39: #{_lambda_.1} parent=5 // pred_region
      %s199 = ssub.s32 %s18, 1
      %p200 = scmp.lt.s32.totalorder %s23, 1
      %s201 = scalar_select %p200, %s23, 1
      %s202 = smul.addr %s201, 60
      %s203 = smul.addr %s202, 8
      %s204 = scalar_lea.vmem %s1, %s203
      %p205 = pneg %p44
      %p206 = pneg %p41
      %p207 = pneg %p65
      %p208 = pneg %p62
      %p209 = pneg %p86
      %p210 = pneg %p83
      %p211 = pneg %p107
      %p212 = pneg %p104
      %p213 = pneg %p128
      %p214 = pneg %p125
      %p215 = pneg %p154
      %p216 = pneg %p151
      %p217 = scmp.lt.s32.totalorder %s23, 1
      %s218 = scalar_select %p217, %s23, 1
      %s219 = smul.addr %s218, 4
      %s220 = smul.addr %s219, 4
      %s221 = scalar_lea.vmem %s6, %s220
      %p222 = scmp.lt.s32.totalorder %s23, 1
      %s223 = scalar_select %p222, %s23, 1
      %s224 = smul.addr %s223, 60
      %s225 = smul.addr %s224, 8
      %s226 = scalar_lea.vmem %s1, %s225
      %p227 = scmp.lt.s32.totalorder %s23, 1
      %s228 = scalar_select %p227, %s23, 1
      %s229 = smul.addr %s228, 4
      %s230 = smul.addr %s229, 4
      %s231 = scalar_lea.vmem %s6, %s230
      %s232 = sld [smem:[#allocation4 + %s23]]
      %vm233 = vcmask 64512
      %234 = vst.msk [vmem:[#allocation2] sm:$0xff] %vm233, 0.0
      %vm235 = vcmask 58368
      %236 = vst.msk [vmem:[#allocation2 + $0x8] sm:$0x3] %vm235, 0.0
      %237 = vst.msk [vmem:[#allocation2 + $0x10] sm:$0xff] %vm233, 0.0
      %238 = vst.msk [vmem:[#allocation2 + $0x18] sm:$0x3] %vm235, 0.0
      %239 = vst.msk [vmem:[#allocation2 + $0x20] sm:$0xff] %vm233, 0.0
      %240 = vst.msk [vmem:[#allocation2 + $0x28] sm:$0x3] %vm235, 0.0
      %241 = vst.msk [vmem:[#allocation2 + $0x30] sm:$0xff] %vm233, 0.0
      %242 = vst.msk [vmem:[#allocation2 + $0x38] sm:$0x3] %vm235, 0.0
      %243 = vst.msk [vmem:[#allocation2 + $0x40] sm:$0xff] %vm233, 0.0
      %244 = vst.msk [vmem:[#allocation2 + $0x48] sm:$0x3] %vm235, 0.0
      %245 = vst.msk [vmem:[#allocation2 + $0x50] sm:$0xff] %vm233, 0.0
      %246 = vst.msk [vmem:[#allocation2 + $0x58] sm:$0x3] %vm235, 0.0
      %247 = vst.msk [vmem:[#allocation2 + $0x60] sm:$0xff] %vm233, 0.0
      %248 = vst.msk [vmem:[#allocation2 + $0x68] sm:$0x3] %vm235, 0.0
      %249 = vst.msk [vmem:[#allocation2 + $0x70] sm:$0xff] %vm233, 0.0
      %250 = vst.msk [vmem:[#allocation2 + $0x78] sm:$0x3] %vm235, 0.0
      %251 = vst.msk [vmem:[#allocation2 + $0x80] sm:$0xff] %vm233, 0.0
      %252 = vst.msk [vmem:[#allocation2 + $0x88] sm:$0x3] %vm235, 0.0
      %253 = vst.msk [vmem:[#allocation2 + $0x90] sm:$0xff] %vm233, 0.0
      %254 = vst.msk [vmem:[#allocation2 + $0x98] sm:$0x3] %vm235, 0.0
      %v255 = vld [vmem:[%s2] sm:$0x1]
      %v256 = vld [vmem:[%s2 + $0x1] sm:$0x1]
      %v257 = vld [vmem:[%s2 + $0x2] sm:$0x1]
      %v258 = vld [vmem:[%s2 + $0x3] sm:$0x1]
      %v259 = vld [vmem:[%s2 + $0x4] sm:$0x1]
      %v260 = vld [vmem:[%s2 + $0x5] sm:$0x1]
      %v261 = vld [vmem:[%s2 + $0x6] sm:$0x1]
      %v262 = vld [vmem:[%s2 + $0x7] sm:$0x1]
      %v263 = vld [vmem:[%s2 + $0x8] sm:$0x1]
      %s264 = scalar_lea.vmem %s2, 16
      %v265 = vld [vmem:[%s264] sm:$0x1]
      %v266 = vld [vmem:[%s264 + $0x1] sm:$0x1]
      %v267 = vld [vmem:[%s264 + $0x2] sm:$0x1]
      %v268 = vld [vmem:[%s264 + $0x3] sm:$0x1]
      %v269 = vld [vmem:[%s264 + $0x4] sm:$0x1]
      %v270 = vld [vmem:[%s264 + $0x5] sm:$0x1]
      %v271 = vld [vmem:[%s264 + $0x6] sm:$0x1]
      %v272 = vld [vmem:[%s264 + $0x7] sm:$0x1]
      %v273 = vld [vmem:[%s264 + $0x8] sm:$0x1]
      %v274 = vld [vmem:[%s3] sm:$0x1]
      %s275 = scalar_lea.vmem %s3, 1
      %v276 = vld [vmem:[%s275] sm:$0x1]
      %v277 = vld [vmem:[%s226] sm:$0xf]
      %v278 = vld [vmem:[%s226 + $0x18] sm:$0xf]
      %v279 = vld [vmem:[%s226 + $0x30] sm:$0xf]
      %v280 = vld [vmem:[%s226 + $0x48] sm:$0xf]
      %v281 = vld [vmem:[%s226 + $0x5] sm:$0xf]
      %v282 = vld [vmem:[%s226 + $0x1d] sm:$0xf]
      %v283 = vld [vmem:[%s226 + $0x35] sm:$0xf]
      %v284 = vld [vmem:[%s226 + $0x4d] sm:$0xf]
      %v285 = vld [vmem:[%s226 + $0xa] sm:$0xf]
      %v286 = vld [vmem:[%s226 + $0x22] sm:$0xf]
      %v287 = vld [vmem:[%s226 + $0x3a] sm:$0xf]
      %v288 = vld [vmem:[%s226 + $0x52] sm:$0xf]
      %s289 = scalar_lea.vmem %s226, 120
      %v290 = vld [vmem:[%s289] sm:$0xf]
      %v291 = vld [vmem:[%s289 + $0x18] sm:$0xf]
      %v292 = vld [vmem:[%s289 + $0x30] sm:$0xf]
      %v293 = vld [vmem:[%s289 + $0x48] sm:$0xf]
      %v294 = vld [vmem:[%s289 + $0x5] sm:$0xf]
      %v295 = vld [vmem:[%s289 + $0x1d] sm:$0xf]
      %v296 = vld [vmem:[%s289 + $0x35] sm:$0xf]
      %v297 = vld [vmem:[%s289 + $0x4d] sm:$0xf]
      %v298 = vld [vmem:[%s289 + $0xa] sm:$0xf]
      %v299 = vld [vmem:[%s289 + $0x22] sm:$0xf]
      %v300 = vld [vmem:[%s289 + $0x3a] sm:$0xf]
      %v301 = vld [vmem:[%s289 + $0x52] sm:$0xf]
      %s302 = scalar_lea.vmem %s226, 240
      %v303 = vld [vmem:[%s302] sm:$0xf]
      %v304 = vld [vmem:[%s302 + $0x18] sm:$0xf]
      %v305 = vld [vmem:[%s302 + $0x30] sm:$0xf]
      %v306 = vld [vmem:[%s302 + $0x48] sm:$0xf]
      %v307 = vld [vmem:[%s302 + $0x5] sm:$0xf]
      %v308 = vld [vmem:[%s302 + $0x1d] sm:$0xf]
      %v309 = vld [vmem:[%s302 + $0x35] sm:$0xf]
      %v310 = vld [vmem:[%s302 + $0x4d] sm:$0xf]
      %v311 = vld [vmem:[%s302 + $0xa] sm:$0xf]
      %v312 = vld [vmem:[%s302 + $0x22] sm:$0xf]
      %v313 = vld [vmem:[%s302 + $0x3a] sm:$0xf]
      %v314 = vld [vmem:[%s302 + $0x52] sm:$0xf]
      %v315 = vlaneseq
      %v316 = vshrl.u32 %v315, 7
      %v317 = vmul.u32 %v316, 2
      %v318 = vstv %s232
      %vm319 = vcmp.lt.s32.totalorder %v317, %v318
      %v320 = vlaneseq
      %v321 = vshrl.u32 %v320, 7
      %v322 = vsub.s32 0, %v321
      %v323 = vrot.slane %v255, %v322
      %v324 = vmul.f32 %v277, %v323
      %v325 = vmul.f32 %v278, %v323
      %v326 = vmul.f32 %v279, %v323
      %v327 = vmul.f32 %v280, %v323
      %v329 = vlaneseq
      %v330 = vshrl.u32 %v329, 7
      %v331 = vsub.s32 0, %v330
      %v332 = vrot.slane %v274, %v331
      %v334 = vadd.f32 %v324, %v332
      %v335 = vadd.f32 %v325, %v332
      %v336 = vadd.f32 %v326, %v332
      %v337 = vadd.f32 %v327, %v332
      %v338 = vlaneseq
      %v339 = vshrl.u32 %v338, 7
      %v340 = vsub.s32 0, %v339
      %v341 = vrot.slane %v256, %v340
      %v342 = vmul.f32 %v281, %v341
      %v343 = vmul.f32 %v282, %v341
      %v344 = vmul.f32 %v283, %v341
      %v345 = vmul.f32 %v284, %v341
      %v346 = vlaneseq
      %v347 = vshrl.u32 %v346, 7
      %v348 = vsub.s32 0, %v347
      %v349 = vrot.slane %v257, %v348
      %v350 = vmul.f32 %v285, %v349
      %v351 = vmul.f32 %v286, %v349
      %v352 = vmul.f32 %v287, %v349
      %v353 = vmul.f32 %v288, %v349
      %v354 = vlaneseq
      %v355 = vshrl.u32 %v354, 7
      %v356 = vsub.s32 0, %v355
      %v357 = vrot.slane %v258, %v356
      %v358 = vmul.f32 %v290, %v357
      %v359 = vmul.f32 %v291, %v357
      %v360 = vmul.f32 %v292, %v357
      %v361 = vmul.f32 %v293, %v357
      %v362 = vlaneseq
      %v363 = vshrl.u32 %v362, 7
      %v364 = vsub.s32 0, %v363
      %v365 = vrot.slane %v259, %v364
      %v366 = vmul.f32 %v294, %v365
      %v367 = vmul.f32 %v295, %v365
      %v368 = vmul.f32 %v296, %v365
      %v369 = vmul.f32 %v297, %v365
      %v370 = vlaneseq
      %v371 = vshrl.u32 %v370, 7
      %v372 = vsub.s32 0, %v371
      %v373 = vrot.slane %v260, %v372
      %v374 = vmul.f32 %v298, %v373
      %v375 = vmul.f32 %v299, %v373
      %v376 = vmul.f32 %v300, %v373
      %v377 = vmul.f32 %v301, %v373
      %v378 = vlaneseq
      %v379 = vshrl.u32 %v378, 7
      %v380 = vsub.s32 0, %v379
      %v381 = vrot.slane %v261, %v380
      %v382 = vmul.f32 %v303, %v381
      %v383 = vmul.f32 %v304, %v381
      %v384 = vmul.f32 %v305, %v381
      %v385 = vmul.f32 %v306, %v381
      %v386 = vlaneseq
      %v387 = vshrl.u32 %v386, 7
      %v388 = vsub.s32 0, %v387
      %v389 = vrot.slane %v262, %v388
      %v390 = vmul.f32 %v307, %v389
      %v391 = vmul.f32 %v308, %v389
      %v392 = vmul.f32 %v309, %v389
      %v393 = vmul.f32 %v310, %v389
      %v394 = vlaneseq
      %v395 = vshrl.u32 %v394, 7
      %v396 = vsub.s32 0, %v395
      %v397 = vrot.slane %v263, %v396
      %v398 = vmul.f32 %v311, %v397
      %v399 = vmul.f32 %v312, %v397
      %v400 = vmul.f32 %v313, %v397
      %v401 = vmul.f32 %v314, %v397
      %v402 = vadd.f32 %v334, %v342
      %v403 = vadd.f32 %v335, %v343
      %v404 = vadd.f32 %v336, %v344
      %v405 = vadd.f32 %v337, %v345
      %v406 = vadd.f32 %v350, %v358
      %v407 = vadd.f32 %v351, %v359
      %v408 = vadd.f32 %v352, %v360
      %v409 = vadd.f32 %v353, %v361
      %v410 = vadd.f32 %v366, %v374
      %v411 = vadd.f32 %v367, %v375
      %v412 = vadd.f32 %v368, %v376
      %v413 = vadd.f32 %v369, %v377
      %v414 = vadd.f32 %v382, %v390
      %v415 = vadd.f32 %v383, %v391
      %v416 = vadd.f32 %v384, %v392
      %v417 = vadd.f32 %v385, %v393
      %v418 = vadd.f32 %v402, %v406
      %v419 = vadd.f32 %v403, %v407
      %v420 = vadd.f32 %v404, %v408
      %v421 = vadd.f32 %v405, %v409
      %v422 = vadd.f32 %v410, %v414
      %v423 = vadd.f32 %v411, %v415
      %v424 = vadd.f32 %v412, %v416
      %v425 = vadd.f32 %v413, %v417
      %v426 = vadd.f32 %v418, %v422
      %v427 = vadd.f32 %v419, %v423
      %v428 = vadd.f32 %v420, %v424
      %v429 = vadd.f32 %v421, %v425
      %v430 = vadd.f32 %v426, %v398
      %v431 = vadd.f32 %v427, %v399
      %v432 = vadd.f32 %v428, %v400
      %v433 = vadd.f32 %v429, %v401
      %v434 = vsel %vm319, 1, 0
      %vm435 = vcmp.eq.s32.totalorder %v434, 1
      %v436 = vsel %vm435, %v430, 0.0
      %v437 = vsel %vm435, %v431, 0.0
      %v438 = vsel %vm435, %v432, 0.0
      %v439 = vsel %vm435, %v433, 0.0
      %s440 = scalar_lea.vmem [#allocation2], 80
      %vm441 = vcmask 27648
      %442 = vst.msk [vmem:[%s440 + $0x5] sm:$0xf] %vm441, %v436
      %443 = vst.msk [vmem:[%s440 + $0x15] sm:$0xf] %vm441, %v437
      %444 = vst.msk [vmem:[%s440 + $0x25] sm:$0xf] %vm441, %v438
      %445 = vst.msk [vmem:[%s440 + $0x35] sm:$0xf] %vm441, %v439
      %v446 = vlaneseq
      %v447 = vshrl.u32 %v446, 7
      %v448 = vsub.s32 0, %v447
      %v449 = vrot.slane %v265, %v448
      %v450 = vmul.f32 %v277, %v449
      %v451 = vmul.f32 %v278, %v449
      %v452 = vmul.f32 %v279, %v449
      %v453 = vmul.f32 %v280, %v449
      %v455 = vlaneseq
      %v456 = vshrl.u32 %v455, 7
      %v457 = vsub.s32 0, %v456
      %v458 = vrot.slane %v276, %v457
      %v460 = vadd.f32 %v450, %v458
      %v461 = vadd.f32 %v451, %v458
      %v462 = vadd.f32 %v452, %v458
      %v463 = vadd.f32 %v453, %v458
      %v464 = vlaneseq
      %v465 = vshrl.u32 %v464, 7
      %v466 = vsub.s32 0, %v465
      %v467 = vrot.slane %v266, %v466
      %v468 = vmul.f32 %v281, %v467
      %v469 = vmul.f32 %v282, %v467
      %v470 = vmul.f32 %v283, %v467
      %v471 = vmul.f32 %v284, %v467
      %v472 = vlaneseq
      %v473 = vshrl.u32 %v472, 7
      %v474 = vsub.s32 0, %v473
      %v475 = vrot.slane %v267, %v474
      %v476 = vmul.f32 %v285, %v475
      %v477 = vmul.f32 %v286, %v475
      %v478 = vmul.f32 %v287, %v475
      %v479 = vmul.f32 %v288, %v475
      %v480 = vlaneseq
      %v481 = vshrl.u32 %v480, 7
      %v482 = vsub.s32 0, %v481
      %v483 = vrot.slane %v268, %v482
      %v484 = vmul.f32 %v290, %v483
      %v485 = vmul.f32 %v291, %v483
      %v486 = vmul.f32 %v292, %v483
      %v487 = vmul.f32 %v293, %v483
      %v488 = vlaneseq
      %v489 = vshrl.u32 %v488, 7
      %v490 = vsub.s32 0, %v489
      %v491 = vrot.slane %v269, %v490
      %v492 = vmul.f32 %v294, %v491
      %v493 = vmul.f32 %v295, %v491
      %v494 = vmul.f32 %v296, %v491
      %v495 = vmul.f32 %v297, %v491
      %v496 = vlaneseq
      %v497 = vshrl.u32 %v496, 7
      %v498 = vsub.s32 0, %v497
      %v499 = vrot.slane %v270, %v498
      %v500 = vmul.f32 %v298, %v499
      %v501 = vmul.f32 %v299, %v499
      %v502 = vmul.f32 %v300, %v499
      %v503 = vmul.f32 %v301, %v499
      %v504 = vlaneseq
      %v505 = vshrl.u32 %v504, 7
      %v506 = vsub.s32 0, %v505
      %v507 = vrot.slane %v271, %v506
      %v508 = vmul.f32 %v303, %v507
      %v509 = vmul.f32 %v304, %v507
      %v510 = vmul.f32 %v305, %v507
      %v511 = vmul.f32 %v306, %v507
      %v512 = vlaneseq
      %v513 = vshrl.u32 %v512, 7
      %v514 = vsub.s32 0, %v513
      %v515 = vrot.slane %v272, %v514
      %v516 = vmul.f32 %v307, %v515
      %v517 = vmul.f32 %v308, %v515
      %v518 = vmul.f32 %v309, %v515
      %v519 = vmul.f32 %v310, %v515
      %v520 = vlaneseq
      %v521 = vshrl.u32 %v520, 7
      %v522 = vsub.s32 0, %v521
      %v523 = vrot.slane %v273, %v522
      %v524 = vmul.f32 %v311, %v523
      %v525 = vmul.f32 %v312, %v523
      %v526 = vmul.f32 %v313, %v523
      %v527 = vmul.f32 %v314, %v523
      %v528 = vadd.f32 %v460, %v468
      %v529 = vadd.f32 %v461, %v469
      %v530 = vadd.f32 %v462, %v470
      %v531 = vadd.f32 %v463, %v471
      %v532 = vadd.f32 %v476, %v484
      %v533 = vadd.f32 %v477, %v485
      %v534 = vadd.f32 %v478, %v486
      %v535 = vadd.f32 %v479, %v487
      %v536 = vadd.f32 %v492, %v500
      %v537 = vadd.f32 %v493, %v501
      %v538 = vadd.f32 %v494, %v502
      %v539 = vadd.f32 %v495, %v503
      %v540 = vadd.f32 %v508, %v516
      %v541 = vadd.f32 %v509, %v517
      %v542 = vadd.f32 %v510, %v518
      %v543 = vadd.f32 %v511, %v519
      %v544 = vadd.f32 %v528, %v532
      %v545 = vadd.f32 %v529, %v533
      %v546 = vadd.f32 %v530, %v534
      %v547 = vadd.f32 %v531, %v535
      %v548 = vadd.f32 %v536, %v540
      %v549 = vadd.f32 %v537, %v541
      %v550 = vadd.f32 %v538, %v542
      %v551 = vadd.f32 %v539, %v543
      %v552 = vadd.f32 %v544, %v548
      %v553 = vadd.f32 %v545, %v549
      %v554 = vadd.f32 %v546, %v550
      %v555 = vadd.f32 %v547, %v551
      %v556 = vadd.f32 %v552, %v524
      %v557 = vadd.f32 %v553, %v525
      %v558 = vadd.f32 %v554, %v526
      %v559 = vadd.f32 %v555, %v527
      %v560 = vsel %vm435, %v556, 0.0
      %v561 = vsel %vm435, %v557, 0.0
      %v562 = vsel %vm435, %v558, 0.0
      %v563 = vsel %vm435, %v559, 0.0
      %568 = vrot.lane.b32.xlu0 %v560, 4
      %v569 = vpop.permute.xlu0 %568
      %570 = vrot.lane.b32.xlu0 %v561, 4
      %v571 = vpop.permute.xlu0 %570
      %572 = vrot.lane.b32.xlu0 %v562, 4
      %v573 = vpop.permute.xlu0 %572
      %574 = vrot.lane.b32.xlu0 %v563, 4
      %v575 = vpop.permute.xlu0 %574
      %vm580 = vcmask 60448
      %581 = vst.msk [vmem:[%s440 + $0x5] sm:$0xf] %vm580, %v569
      %582 = vst.msk [vmem:[%s440 + $0x15] sm:$0xf] %vm580, %v571
      %583 = vst.msk [vmem:[%s440 + $0x25] sm:$0xf] %vm580, %v573
      %584 = vst.msk [vmem:[%s440 + $0x35] sm:$0xf] %vm580, %v575
      %v585 = vld [vmem:[%s226 + $0xa] sm:$0xf]
      %v586 = vld [vmem:[%s226 + $0x22] sm:$0xf]
      %v587 = vld [vmem:[%s226 + $0x3a] sm:$0xf]
      %v588 = vld [vmem:[%s226 + $0x52] sm:$0xf]
      %v589 = vld [vmem:[%s226 + $0xf] sm:$0xf]
      %v590 = vld [vmem:[%s226 + $0x27] sm:$0xf]
      %v591 = vld [vmem:[%s226 + $0x3f] sm:$0xf]
      %v592 = vld [vmem:[%s226 + $0x57] sm:$0xf]
      %v593 = vld [vmem:[%s226 + $0x1] sm:$0xf]
      %v594 = vld [vmem:[%s226 + $0x19] sm:$0xf]
      %v595 = vld [vmem:[%s226 + $0x31] sm:$0xf]
      %v596 = vld [vmem:[%s226 + $0x49] sm:$0xf]
      %v597 = vld [vmem:[%s289 + $0xa] sm:$0xf]
      %v598 = vld [vmem:[%s289 + $0x22] sm:$0xf]
      %v599 = vld [vmem:[%s289 + $0x3a] sm:$0xf]
      %v600 = vld [vmem:[%s289 + $0x52] sm:$0xf]
      %v601 = vld [vmem:[%s289 + $0xf] sm:$0xf]
      %v602 = vld [vmem:[%s289 + $0x27] sm:$0xf]
      %v603 = vld [vmem:[%s289 + $0x3f] sm:$0xf]
      %v604 = vld [vmem:[%s289 + $0x57] sm:$0xf]
      %v605 = vld [vmem:[%s289 + $0x1] sm:$0xf]
      %v606 = vld [vmem:[%s289 + $0x19] sm:$0xf]
      %v607 = vld [vmem:[%s289 + $0x31] sm:$0xf]
      %v608 = vld [vmem:[%s289 + $0x49] sm:$0xf]
      %v609 = vld [vmem:[%s302 + $0xa] sm:$0xf]
      %v610 = vld [vmem:[%s302 + $0x22] sm:$0xf]
      %v611 = vld [vmem:[%s302 + $0x3a] sm:$0xf]
      %v612 = vld [vmem:[%s302 + $0x52] sm:$0xf]
      %v613 = vld [vmem:[%s302 + $0xf] sm:$0xf]
      %v614 = vld [vmem:[%s302 + $0x27] sm:$0xf]
      %v615 = vld [vmem:[%s302 + $0x3f] sm:$0xf]
      %v616 = vld [vmem:[%s302 + $0x57] sm:$0xf]
      %v617 = vld [vmem:[%s302 + $0x1] sm:$0xf]
      %v618 = vld [vmem:[%s302 + $0x19] sm:$0xf]
      %v619 = vld [vmem:[%s302 + $0x31] sm:$0xf]
      %v620 = vld [vmem:[%s302 + $0x49] sm:$0xf]
      %v621 = vadd.s32 %v317, 1
      %vm622 = vcmp.lt.s32.totalorder %v621, %v318
      %v623 = vmul.f32 %v585, %v323
      %v624 = vmul.f32 %v586, %v323
      %v625 = vmul.f32 %v587, %v323
      %v626 = vmul.f32 %v588, %v323
      %v627 = vadd.f32 %v623, %v332
      %v628 = vadd.f32 %v624, %v332
      %v629 = vadd.f32 %v625, %v332
      %v630 = vadd.f32 %v626, %v332
      %v631 = vmul.f32 %v589, %v341
      %v632 = vmul.f32 %v590, %v341
      %v633 = vmul.f32 %v591, %v341
      %v634 = vmul.f32 %v592, %v341
      %v635 = vmul.f32 %v593, %v349
      %v636 = vmul.f32 %v594, %v349
      %v637 = vmul.f32 %v595, %v349
      %v638 = vmul.f32 %v596, %v349
      %v639 = vmul.f32 %v597, %v357
      %v640 = vmul.f32 %v598, %v357
      %v641 = vmul.f32 %v599, %v357
      %v642 = vmul.f32 %v600, %v357
      %v643 = vmul.f32 %v601, %v365
      %v644 = vmul.f32 %v602, %v365
      %v645 = vmul.f32 %v603, %v365
      %v646 = vmul.f32 %v604, %v365
      %v647 = vmul.f32 %v605, %v373
      %v648 = vmul.f32 %v606, %v373
      %v649 = vmul.f32 %v607, %v373
      %v650 = vmul.f32 %v608, %v373
      %v651 = vmul.f32 %v609, %v381
      %v652 = vmul.f32 %v610, %v381
      %v653 = vmul.f32 %v611, %v381
      %v654 = vmul.f32 %v612, %v381
      %v655 = vmul.f32 %v613, %v389
      %v656 = vmul.f32 %v614, %v389
      %v657 = vmul.f32 %v615, %v389
      %v658 = vmul.f32 %v616, %v389
      %v659 = vmul.f32 %v617, %v397
      %v660 = vmul.f32 %v618, %v397
      %v661 = vmul.f32 %v619, %v397
      %v662 = vmul.f32 %v620, %v397
      %v663 = vadd.f32 %v627, %v631
      %v664 = vadd.f32 %v628, %v632
      %v665 = vadd.f32 %v629, %v633
      %v666 = vadd.f32 %v630, %v634
      %v667 = vadd.f32 %v635, %v639
      %v668 = vadd.f32 %v636, %v640
      %v669 = vadd.f32 %v637, %v641
      %v670 = vadd.f32 %v638, %v642
      %v671 = vadd.f32 %v643, %v647
      %v672 = vadd.f32 %v644, %v648
      %v673 = vadd.f32 %v645, %v649
      %v674 = vadd.f32 %v646, %v650
      %v675 = vadd.f32 %v651, %v655
      %v676 = vadd.f32 %v652, %v656
      %v677 = vadd.f32 %v653, %v657
      %v678 = vadd.f32 %v654, %v658
      %v679 = vadd.f32 %v663, %v667
      %v680 = vadd.f32 %v664, %v668
      %v681 = vadd.f32 %v665, %v669
      %v682 = vadd.f32 %v666, %v670
      %v683 = vadd.f32 %v671, %v675
      %v684 = vadd.f32 %v672, %v676
      %v685 = vadd.f32 %v673, %v677
      %v686 = vadd.f32 %v674, %v678
      %v687 = vadd.f32 %v679, %v683
      %v688 = vadd.f32 %v680, %v684
      %v689 = vadd.f32 %v681, %v685
      %v690 = vadd.f32 %v682, %v686
      %v691 = vadd.f32 %v687, %v659
      %v692 = vadd.f32 %v688, %v660
      %v693 = vadd.f32 %v689, %v661
      %v694 = vadd.f32 %v690, %v662
      %v695 = vsel %vm622, 1, 0
      %vm696 = vcmp.eq.s32.totalorder %v695, 1
      %v697 = vsel %vm696, %v691, 0.0
      %v698 = vsel %vm696, %v692, 0.0
      %v699 = vsel %vm696, %v693, 0.0
      %v700 = vsel %vm696, %v694, 0.0
      %701 = vst.msk [vmem:[%s440 + $0x1] sm:$0xf] %vm441, %v697
      %702 = vst.msk [vmem:[%s440 + $0x11] sm:$0xf] %vm441, %v698
      %703 = vst.msk [vmem:[%s440 + $0x21] sm:$0xf] %vm441, %v699
      %704 = vst.msk [vmem:[%s440 + $0x31] sm:$0xf] %vm441, %v700
      %v705 = vmul.f32 %v585, %v449
      %v706 = vmul.f32 %v586, %v449
      %v707 = vmul.f32 %v587, %v449
      %v708 = vmul.f32 %v588, %v449
      %v709 = vadd.f32 %v705, %v458
      %v710 = vadd.f32 %v706, %v458
      %v711 = vadd.f32 %v707, %v458
      %v712 = vadd.f32 %v708, %v458
      %v713 = vmul.f32 %v589, %v467
      %v714 = vmul.f32 %v590, %v467
      %v715 = vmul.f32 %v591, %v467
      %v716 = vmul.f32 %v592, %v467
      %v717 = vmul.f32 %v593, %v475
      %v718 = vmul.f32 %v594, %v475
      %v719 = vmul.f32 %v595, %v475
      %v720 = vmul.f32 %v596, %v475
      %v721 = vmul.f32 %v597, %v483
      %v722 = vmul.f32 %v598, %v483
      %v723 = vmul.f32 %v599, %v483
      %v724 = vmul.f32 %v600, %v483
      %v725 = vmul.f32 %v601, %v491
      %v726 = vmul.f32 %v602, %v491
      %v727 = vmul.f32 %v603, %v491
      %v728 = vmul.f32 %v604, %v491
      %v729 = vmul.f32 %v605, %v499
      %v730 = vmul.f32 %v606, %v499
      %v731 = vmul.f32 %v607, %v499
      %v732 = vmul.f32 %v608, %v499
      %v733 = vmul.f32 %v609, %v507
      %v734 = vmul.f32 %v610, %v507
      %v735 = vmul.f32 %v611, %v507
      %v736 = vmul.f32 %v612, %v507
      %v737 = vmul.f32 %v613, %v515
      %v738 = vmul.f32 %v614, %v515
      %v739 = vmul.f32 %v615, %v515
      %v740 = vmul.f32 %v616, %v515
      %v741 = vmul.f32 %v617, %v523
      %v742 = vmul.f32 %v618, %v523
      %v743 = vmul.f32 %v619, %v523
      %v744 = vmul.f32 %v620, %v523
      %v745 = vadd.f32 %v709, %v713
      %v746 = vadd.f32 %v710, %v714
      %v747 = vadd.f32 %v711, %v715
      %v748 = vadd.f32 %v712, %v716
      %v749 = vadd.f32 %v717, %v721
      %v750 = vadd.f32 %v718, %v722
      %v751 = vadd.f32 %v719, %v723
      %v752 = vadd.f32 %v720, %v724
      %v753 = vadd.f32 %v725, %v729
      %v754 = vadd.f32 %v726, %v730
      %v755 = vadd.f32 %v727, %v731
      %v756 = vadd.f32 %v728, %v732
      %v757 = vadd.f32 %v733, %v737
      %v758 = vadd.f32 %v734, %v738
      %v759 = vadd.f32 %v735, %v739
      %v760 = vadd.f32 %v736, %v740
      %v761 = vadd.f32 %v745, %v749
      %v762 = vadd.f32 %v746, %v750
      %v763 = vadd.f32 %v747, %v751
      %v764 = vadd.f32 %v748, %v752
      %v765 = vadd.f32 %v753, %v757
      %v766 = vadd.f32 %v754, %v758
      %v767 = vadd.f32 %v755, %v759
      %v768 = vadd.f32 %v756, %v760
      %v769 = vadd.f32 %v761, %v765
      %v770 = vadd.f32 %v762, %v766
      %v771 = vadd.f32 %v763, %v767
      %v772 = vadd.f32 %v764, %v768
      %v773 = vadd.f32 %v769, %v741
      %v774 = vadd.f32 %v770, %v742
      %v775 = vadd.f32 %v771, %v743
      %v776 = vadd.f32 %v772, %v744
      %v777 = vsel %vm696, %v773, 0.0
      %v778 = vsel %vm696, %v774, 0.0
      %v779 = vsel %vm696, %v775, 0.0
      %v780 = vsel %vm696, %v776, 0.0
      %785 = vrot.lane.b32.xlu0 %v777, 4
      %v786 = vpop.permute.xlu0 %785
      %787 = vrot.lane.b32.xlu0 %v778, 4
      %v788 = vpop.permute.xlu0 %787
      %789 = vrot.lane.b32.xlu0 %v779, 4
      %v790 = vpop.permute.xlu0 %789
      %791 = vrot.lane.b32.xlu0 %v780, 4
      %v792 = vpop.permute.xlu0 %791
      %797 = vst.msk [vmem:[%s440 + $0x1] sm:$0xf] %vm580, %v786
      %798 = vst.msk [vmem:[%s440 + $0x11] sm:$0xf] %vm580, %v788
      %799 = vst.msk [vmem:[%s440 + $0x21] sm:$0xf] %vm580, %v790
      %800 = vst.msk [vmem:[%s440 + $0x31] sm:$0xf] %vm580, %v792
      %v801 = vld [vmem:[%s302] sm:$0xf]
      %v802 = vld [vmem:[%s302 + $0x18] sm:$0xf]
      %v803 = vld [vmem:[%s302 + $0x30] sm:$0xf]
      %v804 = vld [vmem:[%s302 + $0x48] sm:$0xf]
      %v805 = vld [vmem:[%s302 + $0x5] sm:$0xf]
      %v806 = vld [vmem:[%s302 + $0x1d] sm:$0xf]
      %v807 = vld [vmem:[%s302 + $0x35] sm:$0xf]
      %v808 = vld [vmem:[%s302 + $0x4d] sm:$0xf]
      %v809 = vld [vmem:[%s302 + $0xa] sm:$0xf]
      %v810 = vld [vmem:[%s302 + $0x22] sm:$0xf]
      %v811 = vld [vmem:[%s302 + $0x3a] sm:$0xf]
      %v812 = vld [vmem:[%s302 + $0x52] sm:$0xf]
      %s813 = scalar_lea.vmem %s226, 360
      %v814 = vld [vmem:[%s813] sm:$0xf]
      %v815 = vld [vmem:[%s813 + $0x18] sm:$0xf]
      %v816 = vld [vmem:[%s813 + $0x30] sm:$0xf]
      %v817 = vld [vmem:[%s813 + $0x48] sm:$0xf]
      %v818 = vld [vmem:[%s813 + $0x5] sm:$0xf]
      %v819 = vld [vmem:[%s813 + $0x1d] sm:$0xf]
      %v820 = vld [vmem:[%s813 + $0x35] sm:$0xf]
      %v821 = vld [vmem:[%s813 + $0x4d] sm:$0xf]
      %v822 = vld [vmem:[%s813 + $0xa] sm:$0xf]
      %v823 = vld [vmem:[%s813 + $0x22] sm:$0xf]
      %v824 = vld [vmem:[%s813 + $0x3a] sm:$0xf]
      %v825 = vld [vmem:[%s813 + $0x52] sm:$0xf]
      %s826 = scalar_lea.vmem %s226, 24
      %v827 = vld [vmem:[%s826] sm:$0xf]
      %v828 = vld [vmem:[%s826 + $0x18] sm:$0xf]
      %v829 = vld [vmem:[%s826 + $0x30] sm:$0xf]
      %v830 = vld [vmem:[%s826 + $0x48] sm:$0xf]
      %v831 = vld [vmem:[%s826 + $0x5] sm:$0xf]
      %v832 = vld [vmem:[%s826 + $0x1d] sm:$0xf]
      %v833 = vld [vmem:[%s826 + $0x35] sm:$0xf]
      %v834 = vld [vmem:[%s826 + $0x4d] sm:$0xf]
      %v835 = vld [vmem:[%s826 + $0xa] sm:$0xf]
      %v836 = vld [vmem:[%s826 + $0x22] sm:$0xf]
      %v837 = vld [vmem:[%s826 + $0x3a] sm:$0xf]
      %v838 = vld [vmem:[%s826 + $0x52] sm:$0xf]
      %v839 = vmul.f32 %v801, %v323
      %v840 = vmul.f32 %v802, %v323
      %v841 = vmul.f32 %v803, %v323
      %v842 = vmul.f32 %v804, %v323
      %v843 = vadd.f32 %v839, %v332
      %v844 = vadd.f32 %v840, %v332
      %v845 = vadd.f32 %v841, %v332
      %v846 = vadd.f32 %v842, %v332
      %v847 = vmul.f32 %v805, %v341
      %v848 = vmul.f32 %v806, %v341
      %v849 = vmul.f32 %v807, %v341
      %v850 = vmul.f32 %v808, %v341
      %v851 = vmul.f32 %v809, %v349
      %v852 = vmul.f32 %v810, %v349
      %v853 = vmul.f32 %v811, %v349
      %v854 = vmul.f32 %v812, %v349
      %v855 = vmul.f32 %v814, %v357
      %v856 = vmul.f32 %v815, %v357
      %v857 = vmul.f32 %v816, %v357
      %v858 = vmul.f32 %v817, %v357
      %v859 = vmul.f32 %v818, %v365
      %v860 = vmul.f32 %v819, %v365
      %v861 = vmul.f32 %v820, %v365
      %v862 = vmul.f32 %v821, %v365
      %v863 = vmul.f32 %v822, %v373
      %v864 = vmul.f32 %v823, %v373
      %v865 = vmul.f32 %v824, %v373
      %v866 = vmul.f32 %v825, %v373
      %v867 = vmul.f32 %v827, %v381
      %v868 = vmul.f32 %v828, %v381
      %v869 = vmul.f32 %v829, %v381
      %v870 = vmul.f32 %v830, %v381
      %v871 = vmul.f32 %v831, %v389
      %v872 = vmul.f32 %v832, %v389
      %v873 = vmul.f32 %v833, %v389
      %v874 = vmul.f32 %v834, %v389
      %v875 = vmul.f32 %v835, %v397
      %v876 = vmul.f32 %v836, %v397
      %v877 = vmul.f32 %v837, %v397
      %v878 = vmul.f32 %v838, %v397
      %v879 = vadd.f32 %v843, %v847
      %v880 = vadd.f32 %v844, %v848
      %v881 = vadd.f32 %v845, %v849
      %v882 = vadd.f32 %v846, %v850
      %v883 = vadd.f32 %v851, %v855
      %v884 = vadd.f32 %v852, %v856
      %v885 = vadd.f32 %v853, %v857
      %v886 = vadd.f32 %v854, %v858
      %v887 = vadd.f32 %v859, %v863
      %v888 = vadd.f32 %v860, %v864
      %v889 = vadd.f32 %v861, %v865
      %v890 = vadd.f32 %v862, %v866
      %v891 = vadd.f32 %v867, %v871
      %v892 = vadd.f32 %v868, %v872
      %v893 = vadd.f32 %v869, %v873
      %v894 = vadd.f32 %v870, %v874
      %v895 = vadd.f32 %v879, %v883
      %v896 = vadd.f32 %v880, %v884
      %v897 = vadd.f32 %v881, %v885
      %v898 = vadd.f32 %v882, %v886
      %v899 = vadd.f32 %v887, %v891
      %v900 = vadd.f32 %v888, %v892
      %v901 = vadd.f32 %v889, %v893
      %v902 = vadd.f32 %v890, %v894
      %v903 = vadd.f32 %v895, %v899
      %v904 = vadd.f32 %v896, %v900
      %v905 = vadd.f32 %v897, %v901
      %v906 = vadd.f32 %v898, %v902
      %v907 = vadd.f32 %v903, %v875
      %v908 = vadd.f32 %v904, %v876
      %v909 = vadd.f32 %v905, %v877
      %v910 = vadd.f32 %v906, %v878
      %v911 = vsel %vm435, %v907, 0.0
      %v912 = vsel %vm435, %v908, 0.0
      %v913 = vsel %vm435, %v909, 0.0
      %v914 = vsel %vm435, %v910, 0.0
      %s915 = scalar_lea.vmem [#allocation2], 16
      %916 = vst.msk [vmem:[%s915 + $0x5] sm:$0xf] %vm441, %v911
      %917 = vst.msk [vmem:[%s915 + $0x15] sm:$0xf] %vm441, %v912
      %918 = vst.msk [vmem:[%s915 + $0x25] sm:$0xf] %vm441, %v913
      %919 = vst.msk [vmem:[%s915 + $0x35] sm:$0xf] %vm441, %v914
      %v920 = vmul.f32 %v801, %v449
      %v921 = vmul.f32 %v802, %v449
      %v922 = vmul.f32 %v803, %v449
      %v923 = vmul.f32 %v804, %v449
      %v924 = vadd.f32 %v920, %v458
      %v925 = vadd.f32 %v921, %v458
      %v926 = vadd.f32 %v922, %v458
      %v927 = vadd.f32 %v923, %v458
      %v928 = vmul.f32 %v805, %v467
      %v929 = vmul.f32 %v806, %v467
      %v930 = vmul.f32 %v807, %v467
      %v931 = vmul.f32 %v808, %v467
      %v932 = vmul.f32 %v809, %v475
      %v933 = vmul.f32 %v810, %v475
      %v934 = vmul.f32 %v811, %v475
      %v935 = vmul.f32 %v812, %v475
      %v936 = vmul.f32 %v814, %v483
      %v937 = vmul.f32 %v815, %v483
      %v938 = vmul.f32 %v816, %v483
      %v939 = vmul.f32 %v817, %v483
      %v940 = vmul.f32 %v818, %v491
      %v941 = vmul.f32 %v819, %v491
      %v942 = vmul.f32 %v820, %v491
      %v943 = vmul.f32 %v821, %v491
      %v944 = vmul.f32 %v822, %v499
      %v945 = vmul.f32 %v823, %v499
      %v946 = vmul.f32 %v824, %v499
      %v947 = vmul.f32 %v825, %v499
      %v948 = vmul.f32 %v827, %v507
      %v949 = vmul.f32 %v828, %v507
      %v950 = vmul.f32 %v829, %v507
      %v951 = vmul.f32 %v830, %v507
      %v952 = vmul.f32 %v831, %v515
      %v953 = vmul.f32 %v832, %v515
      %v954 = vmul.f32 %v833, %v515
      %v955 = vmul.f32 %v834, %v515
      %v956 = vmul.f32 %v835, %v523
      %v957 = vmul.f32 %v836, %v523
      %v958 = vmul.f32 %v837, %v523
      %v959 = vmul.f32 %v838, %v523
      %v960 = vadd.f32 %v924, %v928
      %v961 = vadd.f32 %v925, %v929
      %v962 = vadd.f32 %v926, %v930
      %v963 = vadd.f32 %v927, %v931
      %v964 = vadd.f32 %v932, %v936
      %v965 = vadd.f32 %v933, %v937
      %v966 = vadd.f32 %v934, %v938
      %v967 = vadd.f32 %v935, %v939
      %v968 = vadd.f32 %v940, %v944
      %v969 = vadd.f32 %v941, %v945
      %v970 = vadd.f32 %v942, %v946
      %v971 = vadd.f32 %v943, %v947
      %v972 = vadd.f32 %v948, %v952
      %v973 = vadd.f32 %v949, %v953
      %v974 = vadd.f32 %v950, %v954
      %v975 = vadd.f32 %v951, %v955
      %v976 = vadd.f32 %v960, %v964
      %v977 = vadd.f32 %v961, %v965
      %v978 = vadd.f32 %v962, %v966
      %v979 = vadd.f32 %v963, %v967
      %v980 = vadd.f32 %v968, %v972
      %v981 = vadd.f32 %v969, %v973
      %v982 = vadd.f32 %v970, %v974
      %v983 = vadd.f32 %v971, %v975
      %v984 = vadd.f32 %v976, %v980
      %v985 = vadd.f32 %v977, %v981
      %v986 = vadd.f32 %v978, %v982
      %v987 = vadd.f32 %v979, %v983
      %v988 = vadd.f32 %v984, %v956
      %v989 = vadd.f32 %v985, %v957
      %v990 = vadd.f32 %v986, %v958
      %v991 = vadd.f32 %v987, %v959
      %v992 = vsel %vm435, %v988, 0.0
      %v993 = vsel %vm435, %v989, 0.0
      %v994 = vsel %vm435, %v990, 0.0
      %v995 = vsel %vm435, %v991, 0.0
      %1000 = vrot.lane.b32.xlu0 %v992, 4
      %v1001 = vpop.permute.xlu0 %1000
      %1002 = vrot.lane.b32.xlu0 %v993, 4
      %v1003 = vpop.permute.xlu0 %1002
      %1004 = vrot.lane.b32.xlu0 %v994, 4
      %v1005 = vpop.permute.xlu0 %1004
      %1006 = vrot.lane.b32.xlu0 %v995, 4
      %v1007 = vpop.permute.xlu0 %1006
      %1012 = vst.msk [vmem:[%s915 + $0x5] sm:$0xf] %vm580, %v1001
      %1013 = vst.msk [vmem:[%s915 + $0x15] sm:$0xf] %vm580, %v1003
      %1014 = vst.msk [vmem:[%s915 + $0x25] sm:$0xf] %vm580, %v1005
      %1015 = vst.msk [vmem:[%s915 + $0x35] sm:$0xf] %vm580, %v1007
      %v1016 = vld [vmem:[%s302 + $0xa] sm:$0xf]
      %v1017 = vld [vmem:[%s302 + $0x22] sm:$0xf]
      %v1018 = vld [vmem:[%s302 + $0x3a] sm:$0xf]
      %v1019 = vld [vmem:[%s302 + $0x52] sm:$0xf]
      %v1020 = vld [vmem:[%s302 + $0xf] sm:$0xf]
      %v1021 = vld [vmem:[%s302 + $0x27] sm:$0xf]
      %v1022 = vld [vmem:[%s302 + $0x3f] sm:$0xf]
      %v1023 = vld [vmem:[%s302 + $0x57] sm:$0xf]
      %v1024 = vld [vmem:[%s302 + $0x1] sm:$0xf]
      %v1025 = vld [vmem:[%s302 + $0x19] sm:$0xf]
      %v1026 = vld [vmem:[%s302 + $0x31] sm:$0xf]
      %v1027 = vld [vmem:[%s302 + $0x49] sm:$0xf]
      %v1028 = vld [vmem:[%s813 + $0xa] sm:$0xf]
      %v1029 = vld [vmem:[%s813 + $0x22] sm:$0xf]
      %v1030 = vld [vmem:[%s813 + $0x3a] sm:$0xf]
      %v1031 = vld [vmem:[%s813 + $0x52] sm:$0xf]
      %v1032 = vld [vmem:[%s813 + $0xf] sm:$0xf]
      %v1033 = vld [vmem:[%s813 + $0x27] sm:$0xf]
      %v1034 = vld [vmem:[%s813 + $0x3f] sm:$0xf]
      %v1035 = vld [vmem:[%s813 + $0x57] sm:$0xf]
      %v1036 = vld [vmem:[%s813 + $0x1] sm:$0xf]
      %v1037 = vld [vmem:[%s813 + $0x19] sm:$0xf]
      %v1038 = vld [vmem:[%s813 + $0x31] sm:$0xf]
      %v1039 = vld [vmem:[%s813 + $0x49] sm:$0xf]
      %v1040 = vld [vmem:[%s826 + $0xa] sm:$0xf]
      %v1041 = vld [vmem:[%s826 + $0x22] sm:$0xf]
      %v1042 = vld [vmem:[%s826 + $0x3a] sm:$0xf]
      %v1043 = vld [vmem:[%s826 + $0x52] sm:$0xf]
      %v1044 = vld [vmem:[%s826 + $0xf] sm:$0xf]
      %v1045 = vld [vmem:[%s826 + $0x27] sm:$0xf]
      %v1046 = vld [vmem:[%s826 + $0x3f] sm:$0xf]
      %v1047 = vld [vmem:[%s826 + $0x57] sm:$0xf]
      %v1048 = vld [vmem:[%s826 + $0x1] sm:$0xf]
      %v1049 = vld [vmem:[%s826 + $0x19] sm:$0xf]
      %v1050 = vld [vmem:[%s826 + $0x31] sm:$0xf]
      %v1051 = vld [vmem:[%s826 + $0x49] sm:$0xf]
      %v1052 = vmul.f32 %v1016, %v323
      %v1053 = vmul.f32 %v1017, %v323
      %v1054 = vmul.f32 %v1018, %v323
      %v1055 = vmul.f32 %v1019, %v323
      %v1056 = vadd.f32 %v1052, %v332
      %v1057 = vadd.f32 %v1053, %v332
      %v1058 = vadd.f32 %v1054, %v332
      %v1059 = vadd.f32 %v1055, %v332
      %v1060 = vmul.f32 %v1020, %v341
      %v1061 = vmul.f32 %v1021, %v341
      %v1062 = vmul.f32 %v1022, %v341
      %v1063 = vmul.f32 %v1023, %v341
      %v1064 = vmul.f32 %v1024, %v349
      %v1065 = vmul.f32 %v1025, %v349
      %v1066 = vmul.f32 %v1026, %v349
      %v1067 = vmul.f32 %v1027, %v349
      %v1068 = vmul.f32 %v1028, %v357
      %v1069 = vmul.f32 %v1029, %v357
      %v1070 = vmul.f32 %v1030, %v357
      %v1071 = vmul.f32 %v1031, %v357
      %v1072 = vmul.f32 %v1032, %v365
      %v1073 = vmul.f32 %v1033, %v365
      %v1074 = vmul.f32 %v1034, %v365
      %v1075 = vmul.f32 %v1035, %v365
      %v1076 = vmul.f32 %v1036, %v373
      %v1077 = vmul.f32 %v1037, %v373
      %v1078 = vmul.f32 %v1038, %v373
      %v1079 = vmul.f32 %v1039, %v373
      %v1080 = vmul.f32 %v1040, %v381
      %v1081 = vmul.f32 %v1041, %v381
      %v1082 = vmul.f32 %v1042, %v381
      %v1083 = vmul.f32 %v1043, %v381
      %v1084 = vmul.f32 %v1044, %v389
      %v1085 = vmul.f32 %v1045, %v389
      %v1086 = vmul.f32 %v1046, %v389
      %v1087 = vmul.f32 %v1047, %v389
      %v1088 = vmul.f32 %v1048, %v397
      %v1089 = vmul.f32 %v1049, %v397
      %v1090 = vmul.f32 %v1050, %v397
      %v1091 = vmul.f32 %v1051, %v397
      %v1092 = vadd.f32 %v1056, %v1060
      %v1093 = vadd.f32 %v1057, %v1061
      %v1094 = vadd.f32 %v1058, %v1062
      %v1095 = vadd.f32 %v1059, %v1063
      %v1096 = vadd.f32 %v1064, %v1068
      %v1097 = vadd.f32 %v1065, %v1069
      %v1098 = vadd.f32 %v1066, %v1070
      %v1099 = vadd.f32 %v1067, %v1071
      %v1100 = vadd.f32 %v1072, %v1076
      %v1101 = vadd.f32 %v1073, %v1077
      %v1102 = vadd.f32 %v1074, %v1078
      %v1103 = vadd.f32 %v1075, %v1079
      %v1104 = vadd.f32 %v1080, %v1084
      %v1105 = vadd.f32 %v1081, %v1085
      %v1106 = vadd.f32 %v1082, %v1086
      %v1107 = vadd.f32 %v1083, %v1087
      %v1108 = vadd.f32 %v1092, %v1096
      %v1109 = vadd.f32 %v1093, %v1097
      %v1110 = vadd.f32 %v1094, %v1098
      %v1111 = vadd.f32 %v1095, %v1099
      %v1112 = vadd.f32 %v1100, %v1104
      %v1113 = vadd.f32 %v1101, %v1105
      %v1114 = vadd.f32 %v1102, %v1106
      %v1115 = vadd.f32 %v1103, %v1107
      %v1116 = vadd.f32 %v1108, %v1112
      %v1117 = vadd.f32 %v1109, %v1113
      %v1118 = vadd.f32 %v1110, %v1114
      %v1119 = vadd.f32 %v1111, %v1115
      %v1120 = vadd.f32 %v1116, %v1088
      %v1121 = vadd.f32 %v1117, %v1089
      %v1122 = vadd.f32 %v1118, %v1090
      %v1123 = vadd.f32 %v1119, %v1091
      %v1124 = vsel %vm696, %v1120, 0.0
      %v1125 = vsel %vm696, %v1121, 0.0
      %v1126 = vsel %vm696, %v1122, 0.0
      %v1127 = vsel %vm696, %v1123, 0.0
      %1128 = vst.msk [vmem:[%s915 + $0x1] sm:$0xf] %vm441, %v1124
      %1129 = vst.msk [vmem:[%s915 + $0x11] sm:$0xf] %vm441, %v1125
      %1130 = vst.msk [vmem:[%s915 + $0x21] sm:$0xf] %vm441, %v1126
      %1131 = vst.msk [vmem:[%s915 + $0x31] sm:$0xf] %vm441, %v1127
      %v1132 = vmul.f32 %v1016, %v449
      %v1133 = vmul.f32 %v1017, %v449
      %v1134 = vmul.f32 %v1018, %v449
      %v1135 = vmul.f32 %v1019, %v449
      %v1136 = vadd.f32 %v1132, %v458
      %v1137 = vadd.f32 %v1133, %v458
      %v1138 = vadd.f32 %v1134, %v458
      %v1139 = vadd.f32 %v1135, %v458
      %v1140 = vmul.f32 %v1020, %v467
      %v1141 = vmul.f32 %v1021, %v467
      %v1142 = vmul.f32 %v1022, %v467
      %v1143 = vmul.f32 %v1023, %v467
      %v1144 = vmul.f32 %v1024, %v475
      %v1145 = vmul.f32 %v1025, %v475
      %v1146 = vmul.f32 %v1026, %v475
      %v1147 = vmul.f32 %v1027, %v475
      %v1148 = vmul.f32 %v1028, %v483
      %v1149 = vmul.f32 %v1029, %v483
      %v1150 = vmul.f32 %v1030, %v483
      %v1151 = vmul.f32 %v1031, %v483
      %v1152 = vmul.f32 %v1032, %v491
      %v1153 = vmul.f32 %v1033, %v491
      %v1154 = vmul.f32 %v1034, %v491
      %v1155 = vmul.f32 %v1035, %v491
      %v1156 = vmul.f32 %v1036, %v499
      %v1157 = vmul.f32 %v1037, %v499
      %v1158 = vmul.f32 %v1038, %v499
      %v1159 = vmul.f32 %v1039, %v499
      %v1160 = vmul.f32 %v1040, %v507
      %v1161 = vmul.f32 %v1041, %v507
      %v1162 = vmul.f32 %v1042, %v507
      %v1163 = vmul.f32 %v1043, %v507
      %v1164 = vmul.f32 %v1044, %v515
      %v1165 = vmul.f32 %v1045, %v515
      %v1166 = vmul.f32 %v1046, %v515
      %v1167 = vmul.f32 %v1047, %v515
      %v1168 = vmul.f32 %v1048, %v523
      %v1169 = vmul.f32 %v1049, %v523
      %v1170 = vmul.f32 %v1050, %v523
      %v1171 = vmul.f32 %v1051, %v523
      %v1172 = vadd.f32 %v1136, %v1140
      %v1173 = vadd.f32 %v1137, %v1141
      %v1174 = vadd.f32 %v1138, %v1142
      %v1175 = vadd.f32 %v1139, %v1143
      %v1176 = vadd.f32 %v1144, %v1148
      %v1177 = vadd.f32 %v1145, %v1149
      %v1178 = vadd.f32 %v1146, %v1150
      %v1179 = vadd.f32 %v1147, %v1151
      %v1180 = vadd.f32 %v1152, %v1156
      %v1181 = vadd.f32 %v1153, %v1157
      %v1182 = vadd.f32 %v1154, %v1158
      %v1183 = vadd.f32 %v1155, %v1159
      %v1184 = vadd.f32 %v1160, %v1164
      %v1185 = vadd.f32 %v1161, %v1165
      %v1186 = vadd.f32 %v1162, %v1166
      %v1187 = vadd.f32 %v1163, %v1167
      %v1188 = vadd.f32 %v1172, %v1176
      %v1189 = vadd.f32 %v1173, %v1177
      %v1190 = vadd.f32 %v1174, %v1178
      %v1191 = vadd.f32 %v1175, %v1179
      %v1192 = vadd.f32 %v1180, %v1184
      %v1193 = vadd.f32 %v1181, %v1185
      %v1194 = vadd.f32 %v1182, %v1186
      %v1195 = vadd.f32 %v1183, %v1187
      %v1196 = vadd.f32 %v1188, %v1192
      %v1197 = vadd.f32 %v1189, %v1193
      %v1198 = vadd.f32 %v1190, %v1194
      %v1199 = vadd.f32 %v1191, %v1195
      %v1200 = vadd.f32 %v1196, %v1168
      %v1201 = vadd.f32 %v1197, %v1169
      %v1202 = vadd.f32 %v1198, %v1170
      %v1203 = vadd.f32 %v1199, %v1171
      %v1204 = vsel %vm696, %v1200, 0.0
      %v1205 = vsel %vm696, %v1201, 0.0
      %v1206 = vsel %vm696, %v1202, 0.0
      %v1207 = vsel %vm696, %v1203, 0.0
      %1212 = vrot.lane.b32.xlu0 %v1204, 4
      %v1213 = vpop.permute.xlu0 %1212
      %1214 = vrot.lane.b32.xlu0 %v1205, 4
      %v1215 = vpop.permute.xlu0 %1214
      %1216 = vrot.lane.b32.xlu0 %v1206, 4
      %v1217 = vpop.permute.xlu0 %1216
      %1218 = vrot.lane.b32.xlu0 %v1207, 4
      %v1219 = vpop.permute.xlu0 %1218
      %1224 = vst.msk [vmem:[%s915 + $0x1] sm:$0xf] %vm580, %v1213
      %1225 = vst.msk [vmem:[%s915 + $0x11] sm:$0xf] %vm580, %v1215
      %1226 = vst.msk [vmem:[%s915 + $0x21] sm:$0xf] %vm580, %v1217
      %1227 = vst.msk [vmem:[%s915 + $0x31] sm:$0xf] %vm580, %v1219
      %s1228 = sadd.s32 %s23, 2
      %s1229 = sld [smem:[#allocation4 + %s1228]]
      %v1230 = vld [vmem:[%s4] sm:$0x1]
      %v1231 = vld [vmem:[%s4 + $0x1] sm:$0x1]
      %v1232 = vld [vmem:[%s4 + $0x2] sm:$0x1]
      %v1233 = vld [vmem:[%s4 + $0x3] sm:$0x1]
      %v1234 = vld [vmem:[%s4 + $0x4] sm:$0x1]
      %v1235 = vld [vmem:[%s4 + $0x5] sm:$0x1]
      %v1236 = vld [vmem:[%s4 + $0x6] sm:$0x1]
      %v1237 = vld [vmem:[%s4 + $0x7] sm:$0x1]
      %v1238 = vld [vmem:[%s4 + $0x8] sm:$0x1]
      %s1239 = scalar_lea.vmem %s4, 16
      %v1240 = vld [vmem:[%s1239] sm:$0x1]
      %v1241 = vld [vmem:[%s1239 + $0x1] sm:$0x1]
      %v1242 = vld [vmem:[%s1239 + $0x2] sm:$0x1]
      %v1243 = vld [vmem:[%s1239 + $0x3] sm:$0x1]
      %v1244 = vld [vmem:[%s1239 + $0x4] sm:$0x1]
      %v1245 = vld [vmem:[%s1239 + $0x5] sm:$0x1]
      %v1246 = vld [vmem:[%s1239 + $0x6] sm:$0x1]
      %v1247 = vld [vmem:[%s1239 + $0x7] sm:$0x1]
      %v1248 = vld [vmem:[%s1239 + $0x8] sm:$0x1]
      %v1249 = vld [vmem:[%s5] sm:$0x1]
      %s1250 = scalar_lea.vmem %s5, 1
      %v1251 = vld [vmem:[%s1250] sm:$0x1]
      %v1252 = vld [vmem:[#allocation2] sm:$0xf]
      %v1253 = vld [vmem:[#allocation2 + $0x10] sm:$0xf]
      %v1254 = vld [vmem:[#allocation2 + $0x20] sm:$0xf]
      %v1255 = vld [vmem:[#allocation2 + $0x30] sm:$0xf]
      %v1256 = vld [vmem:[#allocation2 + $0x5] sm:$0xf]
      %v1257 = vld [vmem:[#allocation2 + $0x15] sm:$0xf]
      %v1258 = vld [vmem:[#allocation2 + $0x25] sm:$0xf]
      %v1259 = vld [vmem:[#allocation2 + $0x35] sm:$0xf]
      %v1260 = vld [vmem:[#allocation2 + $0x1] sm:$0xf]
      %v1261 = vld [vmem:[#allocation2 + $0x11] sm:$0xf]
      %v1262 = vld [vmem:[#allocation2 + $0x21] sm:$0xf]
      %v1263 = vld [vmem:[#allocation2 + $0x31] sm:$0xf]
      %v1264 = vld [vmem:[%s440] sm:$0xf]
      %v1265 = vld [vmem:[%s440 + $0x10] sm:$0xf]
      %v1266 = vld [vmem:[%s440 + $0x20] sm:$0xf]
      %v1267 = vld [vmem:[%s440 + $0x30] sm:$0xf]
      %v1268 = vld [vmem:[%s440 + $0x5] sm:$0xf]
      %v1269 = vld [vmem:[%s440 + $0x15] sm:$0xf]
      %v1270 = vld [vmem:[%s440 + $0x25] sm:$0xf]
      %v1271 = vld [vmem:[%s440 + $0x35] sm:$0xf]
      %v1272 = vld [vmem:[%s440 + $0x1] sm:$0xf]
      %v1273 = vld [vmem:[%s440 + $0x11] sm:$0xf]
      %v1274 = vld [vmem:[%s440 + $0x21] sm:$0xf]
      %v1275 = vld [vmem:[%s440 + $0x31] sm:$0xf]
      %v1276 = vld [vmem:[%s915] sm:$0xf]
      %v1277 = vld [vmem:[%s915 + $0x10] sm:$0xf]
      %v1278 = vld [vmem:[%s915 + $0x20] sm:$0xf]
      %v1279 = vld [vmem:[%s915 + $0x30] sm:$0xf]
      %v1280 = vld [vmem:[%s915 + $0x5] sm:$0xf]
      %v1281 = vld [vmem:[%s915 + $0x15] sm:$0xf]
      %v1282 = vld [vmem:[%s915 + $0x25] sm:$0xf]
      %v1283 = vld [vmem:[%s915 + $0x35] sm:$0xf]
      %v1284 = vld [vmem:[%s915 + $0x1] sm:$0xf]
      %v1285 = vld [vmem:[%s915 + $0x11] sm:$0xf]
      %v1286 = vld [vmem:[%s915 + $0x21] sm:$0xf]
      %v1287 = vld [vmem:[%s915 + $0x31] sm:$0xf]
      %v1288 = vstv %s1229
      %vm1289 = vcmp.lt.s32.totalorder %v316, %v1288
      %v1290 = vlaneseq
      %v1291 = vshrl.u32 %v1290, 7
      %v1292 = vsub.s32 0, %v1291
      %v1293 = vrot.slane %v1230, %v1292
      %v1294 = vmul.f32 %v1252, %v1293
      %v1295 = vmul.f32 %v1253, %v1293
      %v1296 = vmul.f32 %v1254, %v1293
      %v1297 = vmul.f32 %v1255, %v1293
      %v1299 = vlaneseq
      %v1300 = vshrl.u32 %v1299, 7
      %v1301 = vsub.s32 0, %v1300
      %v1302 = vrot.slane %v1249, %v1301
      %v1304 = vadd.f32 %v1294, %v1302
      %v1305 = vadd.f32 %v1295, %v1302
      %v1306 = vadd.f32 %v1296, %v1302
      %v1307 = vadd.f32 %v1297, %v1302
      %v1308 = vlaneseq
      %v1309 = vshrl.u32 %v1308, 7
      %v1310 = vsub.s32 0, %v1309
      %v1311 = vrot.slane %v1231, %v1310
      %v1312 = vmul.f32 %v1256, %v1311
      %v1313 = vmul.f32 %v1257, %v1311
      %v1314 = vmul.f32 %v1258, %v1311
      %v1315 = vmul.f32 %v1259, %v1311
      %v1316 = vlaneseq
      %v1317 = vshrl.u32 %v1316, 7
      %v1318 = vsub.s32 0, %v1317
      %v1319 = vrot.slane %v1232, %v1318
      %v1320 = vmul.f32 %v1260, %v1319
      %v1321 = vmul.f32 %v1261, %v1319
      %v1322 = vmul.f32 %v1262, %v1319
      %v1323 = vmul.f32 %v1263, %v1319
      %v1324 = vlaneseq
      %v1325 = vshrl.u32 %v1324, 7
      %v1326 = vsub.s32 0, %v1325
      %v1327 = vrot.slane %v1233, %v1326
      %v1328 = vmul.f32 %v1264, %v1327
      %v1329 = vmul.f32 %v1265, %v1327
      %v1330 = vmul.f32 %v1266, %v1327
      %v1331 = vmul.f32 %v1267, %v1327
      %v1332 = vlaneseq
      %v1333 = vshrl.u32 %v1332, 7
      %v1334 = vsub.s32 0, %v1333
      %v1335 = vrot.slane %v1234, %v1334
      %v1336 = vmul.f32 %v1268, %v1335
      %v1337 = vmul.f32 %v1269, %v1335
      %v1338 = vmul.f32 %v1270, %v1335
      %v1339 = vmul.f32 %v1271, %v1335
      %v1340 = vlaneseq
      %v1341 = vshrl.u32 %v1340, 7
      %v1342 = vsub.s32 0, %v1341
      %v1343 = vrot.slane %v1235, %v1342
      %v1344 = vmul.f32 %v1272, %v1343
      %v1345 = vmul.f32 %v1273, %v1343
      %v1346 = vmul.f32 %v1274, %v1343
      %v1347 = vmul.f32 %v1275, %v1343
      %v1348 = vlaneseq
      %v1349 = vshrl.u32 %v1348, 7
      %v1350 = vsub.s32 0, %v1349
      %v1351 = vrot.slane %v1236, %v1350
      %v1352 = vmul.f32 %v1276, %v1351
      %v1353 = vmul.f32 %v1277, %v1351
      %v1354 = vmul.f32 %v1278, %v1351
      %v1355 = vmul.f32 %v1279, %v1351
      %v1356 = vlaneseq
      %v1357 = vshrl.u32 %v1356, 7
      %v1358 = vsub.s32 0, %v1357
      %v1359 = vrot.slane %v1237, %v1358
      %v1360 = vmul.f32 %v1280, %v1359
      %v1361 = vmul.f32 %v1281, %v1359
      %v1362 = vmul.f32 %v1282, %v1359
      %v1363 = vmul.f32 %v1283, %v1359
      %v1364 = vlaneseq
      %v1365 = vshrl.u32 %v1364, 7
      %v1366 = vsub.s32 0, %v1365
      %v1367 = vrot.slane %v1238, %v1366
      %v1368 = vmul.f32 %v1284, %v1367
      %v1369 = vmul.f32 %v1285, %v1367
      %v1370 = vmul.f32 %v1286, %v1367
      %v1371 = vmul.f32 %v1287, %v1367
      %v1372 = vadd.f32 %v1304, %v1312
      %v1373 = vadd.f32 %v1305, %v1313
      %v1374 = vadd.f32 %v1306, %v1314
      %v1375 = vadd.f32 %v1307, %v1315
      %v1376 = vadd.f32 %v1320, %v1328
      %v1377 = vadd.f32 %v1321, %v1329
      %v1378 = vadd.f32 %v1322, %v1330
      %v1379 = vadd.f32 %v1323, %v1331
      %v1380 = vadd.f32 %v1336, %v1344
      %v1381 = vadd.f32 %v1337, %v1345
      %v1382 = vadd.f32 %v1338, %v1346
      %v1383 = vadd.f32 %v1339, %v1347
      %v1384 = vadd.f32 %v1352, %v1360
      %v1385 = vadd.f32 %v1353, %v1361
      %v1386 = vadd.f32 %v1354, %v1362
      %v1387 = vadd.f32 %v1355, %v1363
      %v1388 = vadd.f32 %v1372, %v1376
      %v1389 = vadd.f32 %v1373, %v1377
      %v1390 = vadd.f32 %v1374, %v1378
      %v1391 = vadd.f32 %v1375, %v1379
      %v1392 = vadd.f32 %v1380, %v1384
      %v1393 = vadd.f32 %v1381, %v1385
      %v1394 = vadd.f32 %v1382, %v1386
      %v1395 = vadd.f32 %v1383, %v1387
      %v1396 = vadd.f32 %v1388, %v1392
      %v1397 = vadd.f32 %v1389, %v1393
      %v1398 = vadd.f32 %v1390, %v1394
      %v1399 = vadd.f32 %v1391, %v1395
      %v1400 = vadd.f32 %v1396, %v1368
      %v1401 = vadd.f32 %v1397, %v1369
      %v1402 = vadd.f32 %v1398, %v1370
      %v1403 = vadd.f32 %v1399, %v1371
      %v1404 = vsel %vm1289, 1, 0
      %vm1405 = vcmp.eq.s32.totalorder %v1404, 1
      %v1406 = vsel %vm1405, %v1400, 0.0
      %v1407 = vsel %vm1405, %v1401, 0.0
      %v1408 = vsel %vm1405, %v1402, 0.0
      %v1409 = vsel %vm1405, %v1403, 0.0
      %vm1410 = vcmask 60416
      %1411 = vst.msk [vmem:[%s231] sm:$0xf] %vm1410, %v1406
      %1412 = vst.msk [vmem:[%s231 + $0x4] sm:$0xf] %vm1410, %v1407
      %1413 = vst.msk [vmem:[%s231 + $0x8] sm:$0xf] %vm1410, %v1408
      %1414 = vst.msk [vmem:[%s231 + $0xc] sm:$0xf] %vm1410, %v1409
      %v1415 = vlaneseq
      %v1416 = vshrl.u32 %v1415, 7
      %v1417 = vsub.s32 0, %v1416
      %v1418 = vrot.slane %v1240, %v1417
      %v1419 = vmul.f32 %v1252, %v1418
      %v1420 = vmul.f32 %v1253, %v1418
      %v1421 = vmul.f32 %v1254, %v1418
      %v1422 = vmul.f32 %v1255, %v1418
      %v1424 = vlaneseq
      %v1425 = vshrl.u32 %v1424, 7
      %v1426 = vsub.s32 0, %v1425
      %v1427 = vrot.slane %v1251, %v1426
      %v1429 = vadd.f32 %v1419, %v1427
      %v1430 = vadd.f32 %v1420, %v1427
      %v1431 = vadd.f32 %v1421, %v1427
      %v1432 = vadd.f32 %v1422, %v1427
      %v1433 = vlaneseq
      %v1434 = vshrl.u32 %v1433, 7
      %v1435 = vsub.s32 0, %v1434
      %v1436 = vrot.slane %v1241, %v1435
      %v1437 = vmul.f32 %v1256, %v1436
      %v1438 = vmul.f32 %v1257, %v1436
      %v1439 = vmul.f32 %v1258, %v1436
      %v1440 = vmul.f32 %v1259, %v1436
      %v1441 = vlaneseq
      %v1442 = vshrl.u32 %v1441, 7
      %v1443 = vsub.s32 0, %v1442
      %v1444 = vrot.slane %v1242, %v1443
      %v1445 = vmul.f32 %v1260, %v1444
      %v1446 = vmul.f32 %v1261, %v1444
      %v1447 = vmul.f32 %v1262, %v1444
      %v1448 = vmul.f32 %v1263, %v1444
      %v1449 = vlaneseq
      %v1450 = vshrl.u32 %v1449, 7
      %v1451 = vsub.s32 0, %v1450
      %v1452 = vrot.slane %v1243, %v1451
      %v1453 = vmul.f32 %v1264, %v1452
      %v1454 = vmul.f32 %v1265, %v1452
      %v1455 = vmul.f32 %v1266, %v1452
      %v1456 = vmul.f32 %v1267, %v1452
      %v1457 = vlaneseq
      %v1458 = vshrl.u32 %v1457, 7
      %v1459 = vsub.s32 0, %v1458
      %v1460 = vrot.slane %v1244, %v1459
      %v1461 = vmul.f32 %v1268, %v1460
      %v1462 = vmul.f32 %v1269, %v1460
      %v1463 = vmul.f32 %v1270, %v1460
      %v1464 = vmul.f32 %v1271, %v1460
      %v1465 = vlaneseq
      %v1466 = vshrl.u32 %v1465, 7
      %v1467 = vsub.s32 0, %v1466
      %v1468 = vrot.slane %v1245, %v1467
      %v1469 = vmul.f32 %v1272, %v1468
      %v1470 = vmul.f32 %v1273, %v1468
      %v1471 = vmul.f32 %v1274, %v1468
      %v1472 = vmul.f32 %v1275, %v1468
      %v1473 = vlaneseq
      %v1474 = vshrl.u32 %v1473, 7
      %v1475 = vsub.s32 0, %v1474
      %v1476 = vrot.slane %v1246, %v1475
      %v1477 = vmul.f32 %v1276, %v1476
      %v1478 = vmul.f32 %v1277, %v1476
      %v1479 = vmul.f32 %v1278, %v1476
      %v1480 = vmul.f32 %v1279, %v1476
      %v1481 = vlaneseq
      %v1482 = vshrl.u32 %v1481, 7
      %v1483 = vsub.s32 0, %v1482
      %v1484 = vrot.slane %v1247, %v1483
      %v1485 = vmul.f32 %v1280, %v1484
      %v1486 = vmul.f32 %v1281, %v1484
      %v1487 = vmul.f32 %v1282, %v1484
      %v1488 = vmul.f32 %v1283, %v1484
      %v1489 = vlaneseq
      %v1490 = vshrl.u32 %v1489, 7
      %v1491 = vsub.s32 0, %v1490
      %v1492 = vrot.slane %v1248, %v1491
      %v1493 = vmul.f32 %v1284, %v1492
      %v1494 = vmul.f32 %v1285, %v1492
      %v1495 = vmul.f32 %v1286, %v1492
      %v1496 = vmul.f32 %v1287, %v1492
      %v1497 = vadd.f32 %v1429, %v1437
      %v1498 = vadd.f32 %v1430, %v1438
      %v1499 = vadd.f32 %v1431, %v1439
      %v1500 = vadd.f32 %v1432, %v1440
      %v1501 = vadd.f32 %v1445, %v1453
      %v1502 = vadd.f32 %v1446, %v1454
      %v1503 = vadd.f32 %v1447, %v1455
      %v1504 = vadd.f32 %v1448, %v1456
      %v1505 = vadd.f32 %v1461, %v1469
      %v1506 = vadd.f32 %v1462, %v1470
      %v1507 = vadd.f32 %v1463, %v1471
      %v1508 = vadd.f32 %v1464, %v1472
      %v1509 = vadd.f32 %v1477, %v1485
      %v1510 = vadd.f32 %v1478, %v1486
      %v1511 = vadd.f32 %v1479, %v1487
      %v1512 = vadd.f32 %v1480, %v1488
      %v1513 = vadd.f32 %v1497, %v1501
      %v1514 = vadd.f32 %v1498, %v1502
      %v1515 = vadd.f32 %v1499, %v1503
      %v1516 = vadd.f32 %v1500, %v1504
      %v1517 = vadd.f32 %v1505, %v1509
      %v1518 = vadd.f32 %v1506, %v1510
      %v1519 = vadd.f32 %v1507, %v1511
      %v1520 = vadd.f32 %v1508, %v1512
      %v1521 = vadd.f32 %v1513, %v1517
      %v1522 = vadd.f32 %v1514, %v1518
      %v1523 = vadd.f32 %v1515, %v1519
      %v1524 = vadd.f32 %v1516, %v1520
      %v1525 = vadd.f32 %v1521, %v1493
      %v1526 = vadd.f32 %v1522, %v1494
      %v1527 = vadd.f32 %v1523, %v1495
      %v1528 = vadd.f32 %v1524, %v1496
      %v1529 = vsel %vm1405, %v1525, 0.0
      %v1530 = vsel %vm1405, %v1526, 0.0
      %v1531 = vsel %vm1405, %v1527, 0.0
      %v1532 = vsel %vm1405, %v1528, 0.0
      %1537 = vrot.lane.b32.xlu0 %v1529, 8
      %v1538 = vpop.permute.xlu0 %1537
      %1539 = vrot.lane.b32.xlu0 %v1530, 8
      %v1540 = vpop.permute.xlu0 %1539
      %1541 = vrot.lane.b32.xlu0 %v1531, 8
      %v1542 = vpop.permute.xlu0 %1541
      %1543 = vrot.lane.b32.xlu0 %v1532, 8
      %v1544 = vpop.permute.xlu0 %1543
      %vm1549 = vcmask 126016
      %1550 = vst.msk [vmem:[%s231] sm:$0xf] %vm1549, %v1538
      %1551 = vst.msk [vmem:[%s231 + $0x4] sm:$0xf] %vm1549, %v1540
      %1552 = vst.msk [vmem:[%s231 + $0x8] sm:$0xf] %vm1549, %v1542
      %1553 = vst.msk [vmem:[%s231 + $0xc] sm:$0xf] %vm1549, %v1544
      %p1554 = scmp.lt.s32.totalorder %s23, 1
      %s1555 = scalar_select %p1554, %s23, 1
      %s1556 = smul.addr %s1555, 4
      %s1557 = smul.addr %s1556, 4
      %s1558 = scalar_lea.vmem %s6, %s1557
      // Predicated region
      $region41: #{_lambda_.1} parent=39 // pred_check
        %p1559 = pneg %p151
      $region42: #{_lambda_.1} parent=39 // pred_check_branch
        %1561 = sbr.rel (%p1559) target = $region44
      $region43: #{_lambda_.1} parent=39 // pred_region
        _
      $region44: #{_lambda_.1} parent=39 // pred_fallthru
        _
    $region40: #{_lambda_.1} parent=5 // pred_fallthru
      _
    %p1562 = scmp.le.s32.totalorder 2, %s18
    // Predicated region
    $region45: #{_lambda_.1} parent=5 // pred_check
      %p1563 = pneg %p1562
    $region46: #{_lambda_.1} parent=5 // pred_check_branch
      %1565 = sbr.rel (%p1563) target = $region48
    $region47: #{_lambda_.1} parent=5 // pred_region
      %s1566 = ssub.s32 %s18, 2
      // Predicated region
      $region49: #{_lambda_.1} parent=47 // pred_check
        %p1567 = pneg %p157
      $region50: #{_lambda_.1} parent=47 // pred_check_branch
        %1569 = sbr.rel (%p1567) target = $region52
      $region51: #{_lambda_.1} parent=47 // pred_region
        %p1570 = scmp.lt.s32.totalorder %s24, 1
        %s1571 = scalar_select %p1570, %s24, 1
        %s1572 = smul.addr %s1571, 4
        %s1573 = smul.addr %s1572, 4
        %s1574 = scalar_lea.vmem %s6, %s1573
      $region52: #{_lambda_.1} parent=47 // pred_fallthru
        _
    $region48: #{_lambda_.1} parent=5 // pred_fallthru
      _
  $region6: #{_lambda_.1} parent=0 // loop_footer
    %s22 = sadd.s32 1, %s18
  $region7: #{_lambda_.1} parent=0 // loop_footer_branch
    %17 = sbr.rel target = $region3
  $region8: #{_lambda_.1} parent=0 // loop_exit
    _

</llo_original>
